<compile_context>
chip_gen: v5e
topology: v5e:2x2
jax: 0.10.0
libtpu: 0.0.40
codegen_flags: <defaults>
</compile_context>

<pallas_src>
from functools import partial

import numpy as np
import jax
import jax.numpy as jnp
from jax.experimental import pallas as pl
from jax.experimental.pallas import tpu as pltpu


def _round_up(x, m):
    return ((x + m - 1) // m) * m


def _local_agg_kernel(h_ref, adj_ref, mask_ref, w_ref, out_ref, *,
                      neg_slope, fuse_scorers, fold_denominator, denom_col):
    h_bf = h_ref[...]                             # (Bb, Np, Dp) bf16
    adj = adj_ref[...].astype(jnp.int32)          # (Bb, Np, Np) int8 DMA -> i32 vregs
    mask = mask_ref[...]                          # (Bb, 1,  Np) int32
    w_f32 = w_ref[...]                            # (4, Dp) f32 (tiny)

    Bb, Np, Dp = h_bf.shape

    if fuse_scorers:
        # One tall MXU call: hw[b, k*Np+i, :] = h[b,i,:] * w[k,:]  (built in bf16).
        w_bf = w_f32.astype(jnp.bfloat16)
        hw = (h_bf[:, None, :, :] * w_bf[None, :, None, :]).reshape(Bb, 4 * Np, Dp)
        e_all = jax.lax.dot_general(
            hw, h_bf,
            dimension_numbers=(((2,), (2,)), ((0,), (0,))),
            preferred_element_type=jnp.float32).reshape(Bb, 4, Np, Np)
        sel = jnp.where(adj == 2, e_all[:, 1], e_all[:, 0])
        sel = jnp.where(adj == 3, e_all[:, 2], sel)
        sel = jnp.where(adj == 4, e_all[:, 3], sel)
    else:
        # Per-scorer loop (large-N / v7x): only ~2 (Np,Np) f32 slabs live at a time.
        sel = None
        for k in range(4):
            w_k = w_f32[k, :].astype(jnp.bfloat16)           # (Dp,)
            hw_k = h_bf * w_k[None, None, :]                  # (Bb, Np, Dp) bf16
            e_k = jax.lax.dot_general(
                hw_k, h_bf,
                dimension_numbers=(((2,), (2,)), ((0,), (0,))),
                preferred_element_type=jnp.float32)
            sel = e_k if sel is None else jnp.where(adj == k + 1, e_k, sel)

    # Single LeakyReLU pass (elementwise, order-equivalent to the reference which
    # activates each e_k before selecting; -9e15 / -inf are written afterwards).
    sel = jnp.where(sel >= 0, sel, neg_slope * sel)
    valid = (adj >= 1) & (adj <= 4)
    scores = jnp.where(valid, sel, jnp.float32(-9e15))        # non-edges
    scores = jnp.where(mask == 1, scores, -jnp.inf)           # masked key columns

    # Row softmax in f32; the denominator either rides the aggregation MXU call
    # (ones column in the Dp padding) or is an explicit cross-lane sum.
    m = jnp.max(scores, axis=-1, keepdims=True)
    p = jnp.exp(scores - m)                                   # (Bb, Np, Np) f32
    p_bf = p.astype(jnp.bfloat16)

    out = jax.lax.dot_general(
        p_bf, h_bf,
        dimension_numbers=(((2,), (1,)), ((0,), (0,))),
        preferred_element_type=jnp.float32)                   # (Bb, Np, Dp) f32

    if fold_denominator:
        s = out[:, :, denom_col:denom_col + 1]                # sum_j p, from the MXU
    else:
        s = jnp.sum(p, axis=-1, keepdims=True)

    out_ref[...] = (out * pl.reciprocal(s, approx=False)).astype(out_ref.dtype)


def _vmem_capacity_bytes():
    try:
        return int(pltpu.get_tpu_info().vmem_capacity_bytes)
    except Exception:
        return 64 * 1024 * 1024    # conservative fallback (v7x per-TC physical VMEM)


def _estimate_vmem_bytes(bb, np_, dp, fused):
    """Rough live-set estimate: 2x-buffered IO blocks + kernel intermediates."""
    nn_f32 = bb * np_ * np_ * 4
    h_blk = bb * np_ * dp * 2            # bf16 hidden block
    adj_blk = bb * np_ * np_             # int8
    mask_blk = bb * np_ * 4
    w_blk = 4 * dp * 4
    out_blk = bb * np_ * dp * 4
    io = 2 * (h_blk + adj_blk + mask_blk + w_blk + out_blk)
    if fused:
        inter = bb * 4 * np_ * dp * 2 + 7 * nn_f32    # hw + e_all(4) + sel/scores/p
    else:
        inter = bb * np_ * dp * 2 + 4 * nn_f32        # hw_k + e_k + sel + p
    inter += bb * np_ * np_ * 2                       # p in bf16
    inter += bb * np_ * np_ * 4                       # adj widened to i32
    inter += bb * np_ * dp * 4                        # f32 matmul accumulator
    return io + inter


def _pick_batch_block(batch, np_, dp, fused, vmem_cap):
    """Largest divisor of batch fitting ~55% of VMEM while keeping >=4 grid steps."""
    budget = int(0.55 * vmem_cap)
    min_steps = min(4, batch)            # >=2 grid steps per TensorCore when possible
    best = 1
    for bb in range(1, batch + 1):
        if batch % bb:
            continue
        if batch // bb < min_steps:
            break
        if _estimate_vmem_bytes(bb, np_, dp, fused) <= budget:
            best = bb
    return best


def local_aggregator(hidden, adj, mask_item, weights, alpha, *, fuse_scorers=None):
    """Pallas implementation of LocalAggregator.forward.

    hidden:    (B, N, D) float32
    adj:       (B, N, N) int (edge types 0..4)
    mask_item: (B, N) bool
    weights:   (4, D) float32 (stacked linear0..linear3 weights)
    alpha:     LeakyReLU negative slope
    """
    B, N, D = hidden.shape

    Np = _round_up(N, 128)     # lane-dense key axis (also 8-aligned query axis)
    Dp = _round_up(D, 128)     # lane-dense feature axis

    fold = Dp > D              # spare zero column -> fold softmax denom into the MXU
    denom_col = D

    # Pad + cast hidden to bf16 once in the wrapper (both matmuls consume bf16).
    hidden_p = jnp.pad(hidden, ((0, 0), (0, Np - N), (0, Dp - D)))
    if fold:
        # Ones column: w is zero there (scores untouched); the aggregation matmul
        # then writes sum_j p[i,j] into this output column for free.
        hidden_p = hidden_p.at[:, :, denom_col].set(1.0)
    hidden_bf = hidden_p.astype(jnp.bfloat16)

    weights_p = jnp.pad(weights, ((0, 0), (0, Dp - D)))              # f32, tiny
    adj_i8 = jnp.pad(adj, ((0, 0), (0, Np - N), (0, Np - N))).astype(jnp.int8)
    mask3 = jnp.pad(mask_item.astype(jnp.int32),
                    ((0, 0), (0, Np - N))).reshape(B, 1, Np)         # padded keys masked

    if fuse_scorers is None:
        fuse_scorers = Np < 256      # tall fused form only where it feeds the MXU best

    vmem_cap = _vmem_capacity_bytes()
    Bb = _pick_batch_block(B, Np, Dp, fuse_scorers, vmem_cap)
    vmem_limit = int(min(0.85 * vmem_cap,
                         max(1.25 * _estimate_vmem_bytes(Bb, Np, Dp, fuse_scorers),
                             32 * 1024 * 1024)))

    kernel = partial(_local_agg_kernel, neg_slope=float(alpha),
                     fuse_scorers=fuse_scorers, fold_denominator=fold,
                     denom_col=denom_col)

    out = pl.pallas_call(
        kernel,
        out_shape=jax.ShapeDtypeStruct((B, Np, Dp), jnp.float32),
        grid=(B // Bb,),
        in_specs=[
            pl.BlockSpec((Bb, Np, Dp), lambda b: (b, 0, 0)),   # hidden (bf16)
            pl.BlockSpec((Bb, Np, Np), lambda b: (b, 0, 0)),   # adj (int8)
            pl.BlockSpec((Bb, 1, Np), lambda b: (b, 0, 0)),    # mask_item (int32)
            # Constant block index: Pallas skips re-DMA on revisit -> fetched once.
            pl.BlockSpec((4, Dp), lambda b: (0, 0)),           # stacked weights (f32)
        ],
        out_specs=pl.BlockSpec((Bb, Np, Dp), lambda b: (b, 0, 0)),
        compiler_params=pltpu.CompilerParams(
            dimension_semantics=("parallel",),                 # v7x: 2 TCs split batch
            vmem_limit_bytes=vmem_limit),
    )(hidden_bf, adj_i8, mask3, weights_p)

    return out[:, :N, :D]


def local_aggregator_ref(hidden, adj, mask_item, weights, alpha):
    """Pure-JAX f32 reference mirroring the PyTorch forward exactly."""
    a_input = hidden[:, :, None, :] * hidden[:, None, :, :]          # (B,N,N,D)
    e = jnp.einsum('bijd,kd->kbij', a_input, weights)                # (4,B,N,N)
    e = jnp.where(e >= 0, e, alpha * e)                              # LeakyReLU
    scores = jnp.where(adj == 1, e[0], -9e15)
    scores = jnp.where(adj == 2, e[1], scores)
    scores = jnp.where(adj == 3, e[2], scores)
    scores = jnp.where(adj == 4, e[3], scores)
    scores = jnp.where(mask_item[:, None, :], scores, -jnp.inf)
    attn = jax.nn.softmax(scores, axis=-1)
    return jnp.einsum('bij,bjd->bid', attn, hidden)


if __name__ == "__main__":
    B, N, D = 8, 8, 32
    alpha = 0.2

    key = jax.random.PRNGKey(0)
    k_h, k_w, k_adj, k_mask, k_bias = jax.random.split(key, 5)

    hidden = jax.random.normal(k_h, (B, N, D), dtype=jnp.float32)

    # PyTorch Linear default init: U(-1/sqrt(dim), 1/sqrt(dim)).
    bound = 1.0 / np.sqrt(D)
    weights = jax.random.uniform(k_w, (4, D), dtype=jnp.float32,
                                 minval=-bound, maxval=bound)
    # Unused-in-forward parameter (self.bias) — created for parity only.
    _bias = jax.random.normal(k_bias, (D,), dtype=jnp.float32)

    # Edge types in {0..4}; 0 means "no edge" -> -9e15 score. Diagonal forced valid
    # so every real row has finite scores.
    adj = jax.random.randint(k_adj, (B, N, N), 0, 5, dtype=jnp.int32)
    adj = adj.at[:, jnp.arange(N), jnp.arange(N)].set(1)

    # Key mask; at least one valid item per batch (all-masked rows would be NaN,
    # same as the PyTorch reference).
    mask_item = jax.random.bernoulli(k_mask, 0.8, (B, N))
    mask_item = mask_item.at[:, 0].set(True)

    ref = local_aggregator_ref(hidden, adj, mask_item, weights, alpha)

    # Auto path (fused 4-scorer MXU call at this padded size).
    out = jax.block_until_ready(
        local_aggregator(hidden, adj, mask_item, weights, alpha))
    np.testing.assert_allclose(np.asarray(out), np.asarray(ref),
                               rtol=5e-2, atol=5e-2)

    # Also exercise the per-scorer (large-N / v7x) code path at small shape.
    out_split = jax.block_until_ready(
        local_aggregator(hidden, adj, mask_item, weights, alpha, fuse_scorers=False))
    np.testing.assert_allclose(np.asarray(out_split), np.asarray(ref),
                               rtol=5e-2, atol=5e-2)

    print("KERNEL_OK")
</pallas_src>

<mosaic_0001>
module attributes {stable_mosaic.version = 11 : i64} {
  func.func @_local_agg_kernel(%arg0: i32, %arg1: memref<2x128x128xbf16, #tpu.memory_space<vmem>>, %arg2: memref<2x128x128xi8, #tpu.memory_space<vmem>>, %arg3: memref<2x1x128xi32, #tpu.memory_space<vmem>>, %arg4: memref<4x128xf32, #tpu.memory_space<vmem>>, %arg5: memref<2x128x128xf32, #tpu.memory_space<vmem>>) attributes {dimension_semantics = [#tpu.dimension_semantics<parallel>], iteration_bounds = array<i64: 4>, scalar_prefetch = 0 : i64, scratch_operands = 0 : i64, tpu.core_type = #tpu.core_type<tc>, window_params = [{transform_indices = @transform_0, window_bounds = array<i64: 2, 128, 128>}, {transform_indices = @transform_1, window_bounds = array<i64: 2, 128, 128>}, {transform_indices = @transform_2, window_bounds = array<i64: 2, 1, 128>}, {pipeline_mode = #tpu.pipeline_mode<synchronous>, transform_indices = @transform_3, window_bounds = array<i64: 4, 128>}, {transform_indices = @transform_4, window_bounds = array<i64: 2, 128, 128>}]} {
    %c0 = arith.constant 0 : index
    %c0_0 = arith.constant 0 : index
    %c0_1 = arith.constant 0 : index
    %0 = vector.load %arg1[%c0, %c0_0, %c0_1] : memref<2x128x128xbf16, #tpu.memory_space<vmem>>, vector<2x128x128xbf16>
    %c0_2 = arith.constant 0 : index
    %c0_3 = arith.constant 0 : index
    %c0_4 = arith.constant 0 : index
    %1 = vector.load %arg2[%c0_2, %c0_3, %c0_4] : memref<2x128x128xi8, #tpu.memory_space<vmem>>, vector<2x128x128xi8>
    %2 = arith.extsi %1 : vector<2x128x128xi8> to vector<2x128x128xi32>
    %c0_5 = arith.constant 0 : index
    %c0_6 = arith.constant 0 : index
    %c0_7 = arith.constant 0 : index
    %3 = vector.load %arg3[%c0_5, %c0_6, %c0_7] : memref<2x1x128xi32, #tpu.memory_space<vmem>>, vector<2x1x128xi32>
    %c0_8 = arith.constant 0 : index
    %c0_9 = arith.constant 0 : index
    %4 = vector.load %arg4[%c0_8, %c0_9] : memref<4x128xf32, #tpu.memory_space<vmem>>, vector<4x128xf32>
    %5 = arith.truncf %4 : vector<4x128xf32> to vector<4x128xbf16>
    %6 = vector.shape_cast %0 : vector<2x128x128xbf16> to vector<2x1x128x128xbf16>
    %7 = vector.shape_cast %5 : vector<4x128xbf16> to vector<1x4x1x128xbf16>
    %8 = vector.broadcast %6 : vector<2x1x128x128xbf16> to vector<2x4x128x128xbf16>
    %9 = vector.broadcast %7 : vector<1x4x1x128xbf16> to vector<2x4x128x128xbf16>
    %10 = arith.mulf %8, %9 : vector<2x4x128x128xbf16>
    %11 = vector.shape_cast %10 : vector<2x4x128x128xbf16> to vector<2x512x128xbf16>
    %cst = arith.constant dense<0.000000e+00> : vector<2x512x128xf32>
    %12 = tpu.matmul %11, %0, %cst {dimension_numbers = #tpu.dot_dimension_numbers<[2], [2], [1], [1], [0, 0, 0, 1, 1, 1], [0], [0]>} : vector<2x512x128xbf16>, vector<2x128x128xbf16>, vector<2x512x128xf32> -> vector<2x512x128xf32>
    %13 = vector.shape_cast %12 : vector<2x512x128xf32> to vector<2x4x128x128xf32>
    %c2_i32 = arith.constant 2 : i32
    %14 = vector.broadcast %c2_i32 : i32 to vector<2x128x128xi32>
    %15 = arith.cmpi eq, %2, %14 : vector<2x128x128xi32>
    %16 = vector.extract_strided_slice %13 {offsets = [0, 1, 0, 0], sizes = [2, 1, 128, 128], strides = [1, 1, 1, 1]} : vector<2x4x128x128xf32> to vector<2x1x128x128xf32>
    %17 = vector.shape_cast %16 : vector<2x1x128x128xf32> to vector<2x128x128xf32>
    %18 = vector.extract_strided_slice %13 {offsets = [0, 0, 0, 0], sizes = [2, 1, 128, 128], strides = [1, 1, 1, 1]} : vector<2x4x128x128xf32> to vector<2x1x128x128xf32>
    %19 = vector.shape_cast %18 : vector<2x1x128x128xf32> to vector<2x128x128xf32>
    %20 = arith.select %15, %17, %19 : vector<2x128x128xi1>, vector<2x128x128xf32>
    %c3_i32 = arith.constant 3 : i32
    %21 = vector.broadcast %c3_i32 : i32 to vector<2x128x128xi32>
    %22 = arith.cmpi eq, %2, %21 : vector<2x128x128xi32>
    %23 = vector.extract_strided_slice %13 {offsets = [0, 2, 0, 0], sizes = [2, 1, 128, 128], strides = [1, 1, 1, 1]} : vector<2x4x128x128xf32> to vector<2x1x128x128xf32>
    %24 = vector.shape_cast %23 : vector<2x1x128x128xf32> to vector<2x128x128xf32>
    %25 = arith.select %22, %24, %20 : vector<2x128x128xi1>, vector<2x128x128xf32>
    %c4_i32 = arith.constant 4 : i32
    %26 = vector.broadcast %c4_i32 : i32 to vector<2x128x128xi32>
    %27 = arith.cmpi eq, %2, %26 : vector<2x128x128xi32>
    %28 = vector.extract_strided_slice %13 {offsets = [0, 3, 0, 0], sizes = [2, 1, 128, 128], strides = [1, 1, 1, 1]} : vector<2x4x128x128xf32> to vector<2x1x128x128xf32>
    %29 = vector.shape_cast %28 : vector<2x1x128x128xf32> to vector<2x128x128xf32>
    %30 = arith.select %27, %29, %25 : vector<2x128x128xi1>, vector<2x128x128xf32>
    %cst_10 = arith.constant 0.000000e+00 : f32
    %31 = vector.broadcast %cst_10 : f32 to vector<2x128x128xf32>
    %32 = arith.cmpf oge, %30, %31 : vector<2x128x128xf32>
    %cst_11 = arith.constant 2.000000e-01 : f32
    %33 = vector.broadcast %cst_11 : f32 to vector<2x128x128xf32>
    %34 = arith.mulf %33, %30 : vector<2x128x128xf32>
    %35 = arith.select %32, %30, %34 : vector<2x128x128xi1>, vector<2x128x128xf32>
    %c1_i32 = arith.constant 1 : i32
    %36 = vector.broadcast %c1_i32 : i32 to vector<2x128x128xi32>
    %37 = arith.cmpi sge, %2, %36 : vector<2x128x128xi32>
    %c4_i32_12 = arith.constant 4 : i32
    %38 = vector.broadcast %c4_i32_12 : i32 to vector<2x128x128xi32>
    %39 = arith.cmpi sle, %2, %38 : vector<2x128x128xi32>
    %40 = arith.andi %37, %39 : vector<2x128x128xi1>
    %cst_13 = arith.constant -9.000000e+15 : f32
    %41 = vector.broadcast %cst_13 : f32 to vector<2x128x128xf32>
    %42 = arith.select %40, %35, %41 : vector<2x128x128xi1>, vector<2x128x128xf32>
    %c1_i32_14 = arith.constant 1 : i32
    %43 = vector.broadcast %c1_i32_14 : i32 to vector<2x1x128xi32>
    %44 = arith.cmpi eq, %3, %43 : vector<2x1x128xi32>
    %cst_15 = arith.constant 0xFF800000 : f32
    %45 = vector.shape_cast %44 : vector<2x1x128xi1> to vector<2x1x128xi1>
    %46 = vector.broadcast %45 : vector<2x1x128xi1> to vector<2x128x128xi1>
    %47 = vector.broadcast %cst_15 : f32 to vector<2x128x128xf32>
    %48 = arith.select %46, %42, %47 : vector<2x128x128xi1>, vector<2x128x128xf32>
    %cst_16 = arith.constant dense<0xFF800000> : vector<2x128xf32>
    %49 = vector.multi_reduction <maximumf>, %48, %cst_16 [2] : vector<2x128x128xf32> to vector<2x128xf32>
    %50 = vector.shape_cast %49 : vector<2x128xf32> to vector<2x128x1xf32>
    %51 = vector.broadcast %50 : vector<2x128x1xf32> to vector<2x128x128xf32>
    %52 = arith.subf %48, %51 : vector<2x128x128xf32>
    %53 = math.exp %52 : vector<2x128x128xf32>
    %54 = arith.truncf %53 : vector<2x128x128xf32> to vector<2x128x128xbf16>
    %cst_17 = arith.constant dense<0.000000e+00> : vector<2x128x128xf32>
    %55 = tpu.matmul %54, %0, %cst_17 {dimension_numbers = #tpu.dot_dimension_numbers<[2], [1], [1], [2], [0, 0, 0, 1, 1, 2], [0], [0]>} : vector<2x128x128xbf16>, vector<2x128x128xbf16>, vector<2x128x128xf32> -> vector<2x128x128xf32>
    %56 = vector.extract_strided_slice %55 {offsets = [0, 0, 32], sizes = [2, 128, 1], strides = [1, 1, 1]} : vector<2x128x128xf32> to vector<2x128x1xf32>
    %57 = tpu.reciprocal %56 : vector<2x128x1xf32> -> vector<2x128x1xf32>
    %58 = vector.broadcast %57 : vector<2x128x1xf32> to vector<2x128x128xf32>
    %59 = arith.mulf %55, %58 : vector<2x128x128xf32>
    %c0_18 = arith.constant 0 : index
    %c0_19 = arith.constant 0 : index
    %c0_20 = arith.constant 0 : index
    %60 = vector.load %arg5[%c0_18, %c0_19, %c0_20] : memref<2x128x128xf32, #tpu.memory_space<vmem>>, vector<2x128x128xf32>
    tpu.vector_store %arg5[%c0_18, %c0_19, %c0_20], %59 {strides = array<i32>} : memref<2x128x128xf32, #tpu.memory_space<vmem>>, vector<2x128x128xf32>,
    return
  }
  func.func @transform_0(%arg0: i32) -> (i32, i32, i32) {
    %c0_i32 = arith.constant 0 : i32
    %c0_i32_0 = arith.constant 0 : i32
    %c0_i32_1 = arith.constant 0 : i32
    return %arg0, %c0_i32, %c0_i32_0 : i32, i32, i32
  }
  func.func @transform_1(%arg0: i32) -> (i32, i32, i32) {
    %c0_i32 = arith.constant 0 : i32
    %c0_i32_0 = arith.constant 0 : i32
    %c0_i32_1 = arith.constant 0 : i32
    return %arg0, %c0_i32, %c0_i32_0 : i32, i32, i32
  }
  func.func @transform_2(%arg0: i32) -> (i32, i32, i32) {
    %c0_i32 = arith.constant 0 : i32
    %c0_i32_0 = arith.constant 0 : i32
    %c0_i32_1 = arith.constant 0 : i32
    return %arg0, %c0_i32, %c0_i32_0 : i32, i32, i32
  }
  func.func @transform_3(%arg0: i32) -> (i32, i32) {
    %c0_i32 = arith.constant 0 : i32
    %c0_i32_0 = arith.constant 0 : i32
    %c0_i32_1 = arith.constant 0 : i32
    return %c0_i32, %c0_i32_0 : i32, i32
  }
  func.func @transform_4(%arg0: i32) -> (i32, i32, i32) {
    %c0_i32 = arith.constant 0 : i32
    %c0_i32_0 = arith.constant 0 : i32
    %c0_i32_1 = arith.constant 0 : i32
    return %arg0, %c0_i32, %c0_i32_0 : i32, i32, i32
  }
}

</mosaic_0001>

<llo_original>
// kernel: tpu_custom_call.1
$region0: #{tpu_custom_call.1}
  #allocation0 [shape = 'u32[]', space=smem, size = 0x4, offset = 0x4, fixed_abs, tag = 'smem constant byte address 0x4 - core index']
  #allocation1 [shape = 'u32[72,128]{1,0:T(1,128)}', space=vmem, size = 0x9000, scoped, tag = 'internal scratch']
  %s0 = inlined_call_operand.hbm [shape: bf16[8,128,128], index: 0, kind: input, shape index: {}]
  %s1 = inlined_call_operand.hbm [shape: s8[8,128,128], index: 1, kind: input, shape index: {}]
  %s2 = inlined_call_operand.hbm [shape: s32[8,1,128], index: 2, kind: input, shape index: {}]
  %s3 = inlined_call_operand.hbm [shape: f32[4,128], index: 3, kind: input, shape index: {}]
  %s4 = inlined_call_operand.hbm [shape: f32[8,128,128], index: 4, kind: output, shape index: {}]
  %s5 = sld [smem:[#allocation0]]
  $region65: #{tpu_custom_call.1} parent=0
    _
  %s7 = ssub.s32 1, %s5
  %s8 = scalar_select 0, %s7, %s5
  $region1: #{tpu_custom_call.1} parent=0
    #allocation2 [shape = 'u8[131072]{0}', space=vmem, size = 0x20000, scoped, tag = 'input window, operand 0']
    #allocation3 [shape = 's32[2]{0}', space=sflag, size = 0x8, scoped, tag = 'scoped memory for tpu_custom_call.1']
    #allocation4 [shape = 's32[2]{0}', space=sflag, size = 0x8, scoped, tag = 'scoped memory for tpu_custom_call.1']
    #allocation5 [shape = 'u8[65536]{0}', space=vmem, size = 0x10000, scoped, tag = 'input window, operand 1']
    #allocation6 [shape = 's32[2]{0}', space=sflag, size = 0x8, scoped, tag = 'scoped memory for tpu_custom_call.1']
    #allocation7 [shape = 'u8[2048]{0}', space=vmem, size = 0x800, scoped, tag = 'input window, operand 2']
    #allocation8 [shape = 'u8[2048]{0}', space=vmem, size = 0x800, scoped, tag = 'input window, operand 3, single buffered']
    #allocation9 [shape = 's32[1]{0}', space=sflag, size = 0x4, scoped, tag = 'scoped memory for tpu_custom_call.1']
    #allocation10 [shape = 'u8[262144]{0}', space=vmem, size = 0x40000, scoped, tag = 'output window, operand 0']
    %9 = vsyncpa [#allocation3], 0
    %s10 = scalar_lea.sflag [#allocation3], 1
    %11 = vsyncpa %s10, 0
    %12 = vsyncpa [#allocation6], 0
    %s13 = scalar_lea.sflag [#allocation6], 1
    %14 = vsyncpa %s13, 0
    %15 = vsyncpa [#allocation9], 0
    %16 = vsyncpa [#allocation4], 0
    %s17 = scalar_lea.sflag [#allocation4], 1
    %18 = vsyncpa %s17, 0
    loop: start=0, step=1, limit=6
    $region2: #{tpu_custom_call.1} parent=1 // loop_pre_header
      _
    $region3: #{tpu_custom_call.1} parent=1 // loop_header
      %s20 = sphi 0, %s24
      %p21 = scmp.ge.s32.totalorder %s20, 6
      %s30 = sphi 0, %s32
      %s33 = sphi 0, %s30
      %s34 = sphi 0, %s33
      %s50 = sphi 0, %s34
      %s56 = sphi 0, %s58
      %s59 = sphi 0, %s56
      %s60 = sphi 0, %s59
      %s76 = sphi 0, %s60
      %s82 = sphi 0, %s84
      %s85 = sphi 0, %s82
      %s86 = sphi 0, %s85
      %s102 = sphi 0, %s86
      %s106 = sphi 0, %s106
      %s108 = sphi 0, %s106
      %s109 = sphi 0, %s108
      %s123 = sphi 0, %s109
      %s129 = sphi 0, %s131
      %s132 = sphi 0, %s129
      %s133 = sphi 0, %s132
      %s149 = sphi 0, %s133
    $region4: #{tpu_custom_call.1} parent=1 // loop_header_branch
      %23 = sbr.rel (%p21) target = $region8
    $region5: #{tpu_custom_call.1} parent=1 // loop_body
      %s25 = ssub.s32 %s20, 1
      %s26 = ssub.s32 %s20, 2
      %s27 = sadd.s32 %s20, 1
      %s28 = ssub.s32 %s20, %s27
      %p29 = scmp.eq.s32.totalorder %s28, 0
      %s31 = sadd.s32 %s30, 1
      %s32 = scalar_select %p29, %s30, %s31
      %p35 = pneg %p29
      %p36 = scmp.eq.s32.totalorder %s20, 3
      %p37 = por %p35, %p36
      %p38 = scmp.ne.s32.totalorder %s30, %s33
      %p39 = scmp.eq.s32.totalorder %s20, 0
      %p40 = por %p38, %p39
      %p41 = scmp.ne.s32.totalorder %s30, %s33
      %p42 = scmp.eq.s32.totalorder %s25, 3
      %p43 = por %p41, %p42
      %p44 = scmp.ne.s32.totalorder %s33, %s34
      %p45 = scmp.eq.s32.totalorder %s25, 0
      %p46 = por %p44, %p45
      %p47 = scmp.ne.s32.totalorder %s33, %s34
      %p48 = scmp.eq.s32.totalorder %s26, 3
      %p49 = por %p47, %p48
      %p51 = scmp.ne.s32.totalorder %s34, %s50
      %p52 = scmp.eq.s32.totalorder %s26, 0
      %p53 = por %p51, %p52
      %s54 = ssub.s32 %s20, %s27
      %p55 = scmp.eq.s32.totalorder %s54, 0
      %s57 = sadd.s32 %s56, 1
      %s58 = scalar_select %p55, %s56, %s57
      %p61 = pneg %p55
      %p62 = scmp.eq.s32.totalorder %s20, 3
      %p63 = por %p61, %p62
      %p64 = scmp.ne.s32.totalorder %s56, %s59
      %p65 = scmp.eq.s32.totalorder %s20, 0
      %p66 = por %p64, %p65
      %p67 = scmp.ne.s32.totalorder %s56, %s59
      %p68 = scmp.eq.s32.totalorder %s25, 3
      %p69 = por %p67, %p68
      %p70 = scmp.ne.s32.totalorder %s59, %s60
      %p71 = scmp.eq.s32.totalorder %s25, 0
      %p72 = por %p70, %p71
      %p73 = scmp.ne.s32.totalorder %s59, %s60
      %p74 = scmp.eq.s32.totalorder %s26, 3
      %p75 = por %p73, %p74
      %p77 = scmp.ne.s32.totalorder %s60, %s76
      %p78 = scmp.eq.s32.totalorder %s26, 0
      %p79 = por %p77, %p78
      %s80 = ssub.s32 %s20, %s27
      %p81 = scmp.eq.s32.totalorder %s80, 0
      %s83 = sadd.s32 %s82, 1
      %s84 = scalar_select %p81, %s82, %s83
      %p87 = pneg %p81
      %p88 = scmp.eq.s32.totalorder %s20, 3
      %p89 = por %p87, %p88
      %p90 = scmp.ne.s32.totalorder %s82, %s85
      %p91 = scmp.eq.s32.totalorder %s20, 0
      %p92 = por %p90, %p91
      %p93 = scmp.ne.s32.totalorder %s82, %s85
      %p94 = scmp.eq.s32.totalorder %s25, 3
      %p95 = por %p93, %p94
      %p96 = scmp.ne.s32.totalorder %s85, %s86
      %p97 = scmp.eq.s32.totalorder %s25, 0
      %p98 = por %p96, %p97
      %p99 = scmp.ne.s32.totalorder %s85, %s86
      %p100 = scmp.eq.s32.totalorder %s26, 3
      %p101 = por %p99, %p100
      %p103 = scmp.ne.s32.totalorder %s86, %s102
      %p104 = scmp.eq.s32.totalorder %s26, 0
      %p105 = por %p103, %p104
      %s107 = sadd.s32 %s106, 1
      %p110 = scmp.eq.s32.totalorder %s20, 3
      %p111 = scmp.ne.s32.totalorder %s106, %s108
      %p112 = scmp.eq.s32.totalorder %s20, 0
      %p113 = por %p111, %p112
      %p114 = scmp.ne.s32.totalorder %s106, %s108
      %p115 = scmp.eq.s32.totalorder %s25, 3
      %p116 = por %p114, %p115
      %p117 = scmp.ne.s32.totalorder %s108, %s109
      %p118 = scmp.eq.s32.totalorder %s25, 0
      %p119 = por %p117, %p118
      %p120 = scmp.ne.s32.totalorder %s108, %s109
      %p121 = scmp.eq.s32.totalorder %s26, 3
      %p122 = por %p120, %p121
      %p124 = scmp.ne.s32.totalorder %s109, %s123
      %p125 = scmp.eq.s32.totalorder %s26, 0
      %p126 = por %p124, %p125
      %s127 = ssub.s32 %s20, %s27
      %p128 = scmp.eq.s32.totalorder %s127, 0
      %s130 = sadd.s32 %s129, 1
      %s131 = scalar_select %p128, %s129, %s130
      %p134 = pneg %p128
      %p135 = scmp.eq.s32.totalorder %s20, 3
      %p136 = por %p134, %p135
      %p137 = scmp.ne.s32.totalorder %s129, %s132
      %p138 = scmp.eq.s32.totalorder %s20, 0
      %p139 = por %p137, %p138
      %p140 = scmp.ne.s32.totalorder %s129, %s132
      %p141 = scmp.eq.s32.totalorder %s25, 3
      %p142 = por %p140, %p141
      %p143 = scmp.ne.s32.totalorder %s132, %s133
      %p144 = scmp.eq.s32.totalorder %s25, 0
      %p145 = por %p143, %p144
      %p146 = scmp.ne.s32.totalorder %s132, %s133
      %p147 = scmp.eq.s32.totalorder %s26, 3
      %p148 = por %p146, %p147
      %p150 = scmp.ne.s32.totalorder %s133, %s149
      %p151 = scmp.eq.s32.totalorder %s26, 0
      %p152 = por %p150, %p151
      %p153 = scmp.le.s32.totalorder 1, %s20
      %p154 = scmp.lt.s32.totalorder %s20, 5
      %p155 = pnand %p153, %p154
      %p156 = pneg %p155
      // Predicated region
      $region9: #{tpu_custom_call.1} parent=5 // pred_check
        _
      $region10: #{tpu_custom_call.1} parent=5 // pred_check_branch
        %158 = sbr.rel (%p155) target = $region12
      $region11: #{tpu_custom_call.1} parent=5 // pred_region
        %s159 = ssub.s32 %s20, 1
        // Predicated region
        $region13: #{tpu_custom_call.1} parent=11 // pred_check
          %p160 = pneg %p119
        $region14: #{tpu_custom_call.1} parent=11 // pred_check_branch
          %162 = sbr.rel (%p160) target = $region16
        $region15: #{tpu_custom_call.1} parent=11 // pred_region
          %164 = vsyncadd [#allocation9], 0
          %s166 = sshll.u32 %s3, 4
          %s167 = int_to_ptr.hbm [resolvable:$true] %s166
          %s168 = sshll.u32 [#allocation8], 4
          %s169 = int_to_ptr.vmem [resolvable:$true] %s168
          %171 = dma.hbm_to_vmem [thread:$0]  %s167, 64, %s169, [#allocation9]
        $region16: #{tpu_custom_call.1} parent=11 // pred_fallthru
          _
      $region12: #{tpu_custom_call.1} parent=5 // pred_fallthru
        _
      %p172 = scmp.lt.s32.totalorder %s20, 4
      // Predicated region
      $region17: #{tpu_custom_call.1} parent=5 // pred_check
        %p173 = pneg %p172
      $region18: #{tpu_custom_call.1} parent=5 // pred_check_branch
        %175 = sbr.rel (%p173) target = $region20
      $region19: #{tpu_custom_call.1} parent=5 // pred_region
        // Predicated region
        $region21: #{tpu_custom_call.1} parent=19 // pred_check
          %p176 = pneg %p40
        $region22: #{tpu_custom_call.1} parent=19 // pred_check_branch
          %178 = sbr.rel (%p176) target = $region24
        $region23: #{tpu_custom_call.1} parent=19 // pred_region
          %s179 = sand.u32 %s30, 1
          %s180 = scalar_lea.sflag [#allocation3], %s179
          %s181 = sand.u32 %s30, 1
          %s182 = smul.addr %s181, 128
          %s183 = scalar_lea.vmem [#allocation2], %s182
          %s184 = smul.u32 2, %s20
          %186 = vsyncadd %s180, 0
          %s187 = smul.addr %s184, 16
          %s188 = smul.addr %s187, 4
          %s189 = scalar_lea.hbm %s0, %s188
          %s190 = sshll.u32 %s189, 4
          %s191 = int_to_ptr.hbm [resolvable:$true] %s190
          %s192 = sshll.u32 %s183, 4
          %s193 = int_to_ptr.vmem [resolvable:$true] %s192
          %198 = dma.hbm_to_vmem [thread:$0]  %s191, 2048, %s193, %s180, 64, 64, 4
        $region24: #{tpu_custom_call.1} parent=19 // pred_fallthru
          _
        // Predicated region
        $region25: #{tpu_custom_call.1} parent=19 // pred_check
          %p199 = pneg %p66
        $region26: #{tpu_custom_call.1} parent=19 // pred_check_branch
          %201 = sbr.rel (%p199) target = $region28
        $region27: #{tpu_custom_call.1} parent=19 // pred_region
          %s202 = sand.u32 %s20, 1
          %s203 = scalar_lea.sflag [#allocation6], %s202
          %s204 = sand.u32 %s56, 1
          %s205 = smul.addr %s204, 64
          %s206 = scalar_lea.vmem [#allocation5], %s205
          %s207 = smul.u32 2, %s20
          %209 = vsyncadd %s203, 0
          %s210 = smul.addr %s207, 4
          %s211 = smul.addr %s210, 8
          %s212 = scalar_lea.hbm %s1, %s211
          %s213 = sshll.u32 %s212, 4
          %s214 = int_to_ptr.hbm [resolvable:$true] %s213
          %s215 = sshll.u32 %s206, 4
          %s216 = int_to_ptr.vmem [resolvable:$true] %s215
          %221 = dma.hbm_to_vmem [thread:$0]  %s214, 1024, %s216, %s203, 128, 128, 8
        $region28: #{tpu_custom_call.1} parent=19 // pred_fallthru
          _
        // Predicated region
        $region29: #{tpu_custom_call.1} parent=19 // pred_check
          %p222 = pneg %p92
        $region30: #{tpu_custom_call.1} parent=19 // pred_check_branch
          %224 = sbr.rel (%p222) target = $region32
        $region31: #{tpu_custom_call.1} parent=19 // pred_region
          %s225 = sand.u32 %s20, 1
          %s226 = scalar_lea.sflag [#allocation6], %s225
          %s227 = sand.u32 %s82, 1
          %s228 = smul.addr %s227, 2
          %s229 = scalar_lea.vmem [#allocation7], %s228
          %s230 = smul.u32 2, %s20
          %232 = vsyncadd %s226, 0
          %s233 = scalar_lea.hbm %s2, %s230
          %s234 = sshll.u32 %s233, 4
          %s235 = int_to_ptr.hbm [resolvable:$true] %s234
          %s236 = sshll.u32 %s229, 4
          %s237 = int_to_ptr.vmem [resolvable:$true] %s236
          %242 = dma.hbm_to_vmem [thread:$0]  %s235, 32, %s237, %s226, 16, 16, 1
        $region32: #{tpu_custom_call.1} parent=19 // pred_fallthru
          _
      $region20: #{tpu_custom_call.1} parent=5 // pred_fallthru
        _
      %p243 = scmp.le.s32.totalorder 1, %s20
      %p244 = scmp.lt.s32.totalorder %s20, 5
      %p245 = pnand %p243, %p244
      %p246 = pneg %p245
      // Predicated region
      $region33: #{tpu_custom_call.1} parent=5 // pred_check
        _
      $region34: #{tpu_custom_call.1} parent=5 // pred_check_branch
        %248 = sbr.rel (%p245) target = $region36
      $region35: #{tpu_custom_call.1} parent=5 // pred_region
        %s249 = ssub.s32 %s20, 1
        %s250 = sand.u32 %s33, 1
        %s251 = scalar_lea.sflag [#allocation3], %s250
        %s252 = sand.u32 %s33, 1
        %s253 = smul.addr %s252, 128
        %s254 = scalar_lea.vmem [#allocation2], %s253
        // Predicated region
        $region37: #{tpu_custom_call.1} parent=35 // pred_check
          %p255 = pneg %p46
        $region38: #{tpu_custom_call.1} parent=35 // pred_check_branch
          %257 = sbr.rel (%p255) target = $region40
        $region39: #{tpu_custom_call.1} parent=35 // pred_region
          %259 = dma.done %s251, 2048
        $region40: #{tpu_custom_call.1} parent=35 // pred_fallthru
          _
        %s260 = sand.u32 %s25, 1
        %s261 = scalar_lea.sflag [#allocation6], %s260
        %s262 = sand.u32 %s59, 1
        %s263 = smul.addr %s262, 64
        %s264 = scalar_lea.vmem [#allocation5], %s263
        // Predicated region
        $region41: #{tpu_custom_call.1} parent=35 // pred_check
          %p265 = pneg %p72
        $region42: #{tpu_custom_call.1} parent=35 // pred_check_branch
          %267 = sbr.rel (%p265) target = $region44
        $region43: #{tpu_custom_call.1} parent=35 // pred_region
          %269 = dma.done %s261, 1024
        $region44: #{tpu_custom_call.1} parent=35 // pred_fallthru
          _
        %s270 = sand.u32 %s25, 1
        %s271 = scalar_lea.sflag [#allocation6], %s270
        %s272 = sand.u32 %s85, 1
        %s273 = smul.addr %s272, 2
        %s274 = scalar_lea.vmem [#allocation7], %s273
        // Predicated region
        $region45: #{tpu_custom_call.1} parent=35 // pred_check
          %p275 = pneg %p98
        $region46: #{tpu_custom_call.1} parent=35 // pred_check_branch
          %277 = sbr.rel (%p275) target = $region48
        $region47: #{tpu_custom_call.1} parent=35 // pred_region
          %279 = dma.done %s271, 32
        $region48: #{tpu_custom_call.1} parent=35 // pred_fallthru
          _
        // Predicated region
        $region49: #{tpu_custom_call.1} parent=35 // pred_check
          %p280 = pneg %p119
        $region50: #{tpu_custom_call.1} parent=35 // pred_check_branch
          %282 = sbr.rel (%p280) target = $region52
        $region51: #{tpu_custom_call.1} parent=35 // pred_region
          %284 = dma.done [#allocation9], 64
        $region52: #{tpu_custom_call.1} parent=35 // pred_fallthru
          _
        %s285 = sand.u32 %s33, 1
        %s286 = scalar_lea.sflag [#allocation3], %s285
        %s287 = sand.u32 %s33, 1
        %s288 = smul.addr %s287, 128
        %s289 = scalar_lea.vmem [#allocation2], %s288
        %p290 = pneg %p46
        %p291 = pneg %p43
        %s292 = sand.u32 %s25, 1
        %s293 = scalar_lea.sflag [#allocation6], %s292
        %s294 = sand.u32 %s59, 1
        %s295 = smul.addr %s294, 64
        %s296 = scalar_lea.vmem [#allocation5], %s295
        %p297 = pneg %p72
        %p298 = pneg %p69
        %s299 = sand.u32 %s25, 1
        %s300 = scalar_lea.sflag [#allocation6], %s299
        %s301 = sand.u32 %s85, 1
        %s302 = smul.addr %s301, 2
        %s303 = scalar_lea.vmem [#allocation7], %s302
        %p304 = pneg %p98
        %p305 = pneg %p95
        %p306 = pneg %p119
        %p307 = pneg %p116
        %p308 = pneg %p145
        %p309 = pneg %p142
        %s310 = sand.u32 %s132, 1
        %s311 = scalar_lea.sflag [#allocation4], %s310
        %s312 = sand.u32 %s132, 1
        %s313 = smul.addr %s312, 256
        %s314 = scalar_lea.vmem [#allocation10], %s313
        %s315 = smul.u32 2, %s25
        %s316 = smul.u32 2, %s25
        %s317 = smul.u32 2, %s25
        %s318 = smul.u32 2, %s25
        %v319 = vld [vmem:[%s254] sm:$0xf]
        %v320 = vld [vmem:[%s254 + $0x4] sm:$0xf]
        %v321 = vld [vmem:[%s254 + $0x8] sm:$0xf]
        %v322 = vld [vmem:[%s254 + $0xc] sm:$0xf]
        %v323 = vld [vmem:[%s254 + $0x10] sm:$0xf]
        %v324 = vld [vmem:[%s254 + $0x14] sm:$0xf]
        %v325 = vld [vmem:[%s254 + $0x18] sm:$0xf]
        %v326 = vld [vmem:[%s254 + $0x1c] sm:$0xf]
        %v327 = vld [vmem:[%s254 + $0x20] sm:$0xf]
        %v328 = vld [vmem:[%s254 + $0x24] sm:$0xf]
        %v329 = vld [vmem:[%s254 + $0x28] sm:$0xf]
        %v330 = vld [vmem:[%s254 + $0x2c] sm:$0xf]
        %v331 = vld [vmem:[%s254 + $0x30] sm:$0xf]
        %v332 = vld [vmem:[%s254 + $0x34] sm:$0xf]
        %v333 = vld [vmem:[%s254 + $0x38] sm:$0xf]
        %v334 = vld [vmem:[%s254 + $0x3c] sm:$0xf]
        %v335 = vld [vmem:[%s254 + $0x40] sm:$0xf]
        %v336 = vld [vmem:[%s254 + $0x44] sm:$0xf]
        %v337 = vld [vmem:[%s254 + $0x48] sm:$0xf]
        %v338 = vld [vmem:[%s254 + $0x4c] sm:$0xf]
        %v339 = vld [vmem:[%s254 + $0x50] sm:$0xf]
        %v340 = vld [vmem:[%s254 + $0x54] sm:$0xf]
        %v341 = vld [vmem:[%s254 + $0x58] sm:$0xf]
        %v342 = vld [vmem:[%s254 + $0x5c] sm:$0xf]
        %v343 = vld [vmem:[%s254 + $0x60] sm:$0xf]
        %v344 = vld [vmem:[%s254 + $0x64] sm:$0xf]
        %v345 = vld [vmem:[%s254 + $0x68] sm:$0xf]
        %v346 = vld [vmem:[%s254 + $0x6c] sm:$0xf]
        %v347 = vld [vmem:[%s254 + $0x70] sm:$0xf]
        %v348 = vld [vmem:[%s254 + $0x74] sm:$0xf]
        %v349 = vld [vmem:[%s254 + $0x78] sm:$0xf]
        %v350 = vld [vmem:[%s254 + $0x7c] sm:$0xf]
        %v351 = vld [vmem:[%s264] sm:$0xff]
        %v352 = vld [vmem:[%s264 + $0x8] sm:$0xff]
        %v353 = vld [vmem:[%s264 + $0x10] sm:$0xff]
        %v354 = vld [vmem:[%s264 + $0x18] sm:$0xff]
        %v355 = vld [vmem:[%s264 + $0x20] sm:$0xff]
        %v356 = vld [vmem:[%s264 + $0x28] sm:$0xff]
        %v357 = vld [vmem:[%s264 + $0x30] sm:$0xff]
        %v358 = vld [vmem:[%s264 + $0x38] sm:$0xff]
        %v359 = vunpack.c.0.s8 %v351
        %v360 = vunpack.c.1.s8 %v351
        %v361 = vunpack.c.2.s8 %v351
        %v362 = vunpack.c.3.s8 %v351
        %v363 = vunpack.c.0.s8 %v352
        %v364 = vunpack.c.1.s8 %v352
        %v365 = vunpack.c.2.s8 %v352
        %v366 = vunpack.c.3.s8 %v352
        %v367 = vunpack.c.0.s8 %v353
        %v368 = vunpack.c.1.s8 %v353
        %v369 = vunpack.c.2.s8 %v353
        %v370 = vunpack.c.3.s8 %v353
        %v371 = vunpack.c.0.s8 %v354
        %v372 = vunpack.c.1.s8 %v354
        %v373 = vunpack.c.2.s8 %v354
        %v374 = vunpack.c.3.s8 %v354
        %v375 = vunpack.c.0.s8 %v355
        %v376 = vunpack.c.1.s8 %v355
        %v377 = vunpack.c.2.s8 %v355
        %v378 = vunpack.c.3.s8 %v355
        %v379 = vunpack.c.0.s8 %v356
        %v380 = vunpack.c.1.s8 %v356
        %v381 = vunpack.c.2.s8 %v356
        %v382 = vunpack.c.3.s8 %v356
        %v383 = vunpack.c.0.s8 %v357
        %v384 = vunpack.c.1.s8 %v357
        %v385 = vunpack.c.2.s8 %v357
        %v386 = vunpack.c.3.s8 %v357
        %v387 = vunpack.c.0.s8 %v358
        %v388 = vunpack.c.1.s8 %v358
        %v389 = vunpack.c.2.s8 %v358
        %v390 = vunpack.c.3.s8 %v358
        %v391 = vld [vmem:[%s274] sm:$0x1]
        %v392 = vld [vmem:[%s274 + $0x1] sm:$0x1]
        %v393 = vld [vmem:[#allocation8] sm:$0xf]
        %v394 = vpack.c.bf16 %v393, %v393
        %v396 = vrot.slane %v394, 3
        %vm397 = vcmask 1040384
        %v400 = vsel %vm397, %v394, %v396
        %vm402 = vcmask 1041409
        %v403 = vsel %vm402, %v394, %v396
        %v405 = vrot.slane %v403, 1
        %v406 = vunpack.i.l.s16 %v400
        %v407 = vunpack.i.h.s16 %v400
        %v408 = vunpack.i.l.s16 %v405
        %v409 = vunpack.i.h.s16 %v405
        %v410 = vpack.i.b16 %v406, %v406
        %v411 = vpack.i.b16 %v407, %v407
        %v412 = vpack.i.b16 %v408, %v408
        %v413 = vpack.i.b16 %v409, %v409
        %v414 = vperm.slane %v410, 0
        %v415 = vperm.slane %v411, 0
        %v416 = vperm.slane %v412, 0
        %v417 = vperm.slane %v413, 0
        %v419 = vpack.i.b16 %v414, %v414
        %v421 = vperm.slane %v419, 0
        %v423 = vpack.i.b16 %v415, %v415
        %v425 = vperm.slane %v423, 0
        %v427 = vpack.i.b16 %v416, %v416
        %v429 = vperm.slane %v427, 0
        %v431 = vpack.i.b16 %v417, %v417
        %v433 = vperm.slane %v431, 0
        %v434 = vunpack.c.l.bf16 %v319
        %v435 = vunpack.c.l.bf16 %v320
        %v436 = vunpack.c.l.bf16 %v321
        %v437 = vunpack.c.l.bf16 %v322
        %v438 = vunpack.c.l.bf16 %v323
        %v439 = vunpack.c.l.bf16 %v324
        %v440 = vunpack.c.l.bf16 %v325
        %v441 = vunpack.c.l.bf16 %v326
        %v442 = vunpack.c.l.bf16 %v327
        %v443 = vunpack.c.l.bf16 %v328
        %v444 = vunpack.c.l.bf16 %v329
        %v445 = vunpack.c.l.bf16 %v330
        %v446 = vunpack.c.l.bf16 %v331
        %v447 = vunpack.c.l.bf16 %v332
        %v448 = vunpack.c.l.bf16 %v333
        %v449 = vunpack.c.l.bf16 %v334
        %v450 = vunpack.c.l.bf16 %v335
        %v451 = vunpack.c.l.bf16 %v336
        %v452 = vunpack.c.l.bf16 %v337
        %v453 = vunpack.c.l.bf16 %v338
        %v454 = vunpack.c.l.bf16 %v339
        %v455 = vunpack.c.l.bf16 %v340
        %v456 = vunpack.c.l.bf16 %v341
        %v457 = vunpack.c.l.bf16 %v342
        %v458 = vunpack.c.l.bf16 %v343
        %v459 = vunpack.c.l.bf16 %v344
        %v460 = vunpack.c.l.bf16 %v345
        %v461 = vunpack.c.l.bf16 %v346
        %v462 = vunpack.c.l.bf16 %v347
        %v463 = vunpack.c.l.bf16 %v348
        %v464 = vunpack.c.l.bf16 %v349
        %v465 = vunpack.c.l.bf16 %v350
        %v466 = vunpack.c.l.bf16 %v421
        %v467 = vunpack.c.l.bf16 %v425
        %v468 = vunpack.c.l.bf16 %v429
        %v469 = vunpack.c.l.bf16 %v433
        %v470 = vmul.f32 %v434, %v466
        %v471 = vmul.f32 %v435, %v466
        %v472 = vmul.f32 %v436, %v466
        %v473 = vmul.f32 %v437, %v466
        %v474 = vmul.f32 %v438, %v466
        %v475 = vmul.f32 %v439, %v466
        %v476 = vmul.f32 %v440, %v466
        %v477 = vmul.f32 %v441, %v466
        %v478 = vmul.f32 %v442, %v466
        %v479 = vmul.f32 %v443, %v466
        %v480 = vmul.f32 %v444, %v466
        %v481 = vmul.f32 %v445, %v466
        %v482 = vmul.f32 %v446, %v466
        %v483 = vmul.f32 %v447, %v466
        %v484 = vmul.f32 %v448, %v466
        %v485 = vmul.f32 %v449, %v466
        %v486 = vmul.f32 %v434, %v467
        %v487 = vmul.f32 %v435, %v467
        %v488 = vmul.f32 %v436, %v467
        %v489 = vmul.f32 %v437, %v467
        %v490 = vmul.f32 %v438, %v467
        %v491 = vmul.f32 %v439, %v467
        %v492 = vmul.f32 %v440, %v467
        %v493 = vmul.f32 %v441, %v467
        %v494 = vmul.f32 %v442, %v467
        %v495 = vmul.f32 %v443, %v467
        %v496 = vmul.f32 %v444, %v467
        %v497 = vmul.f32 %v445, %v467
        %v498 = vmul.f32 %v446, %v467
        %v499 = vmul.f32 %v447, %v467
        %v500 = vmul.f32 %v448, %v467
        %v501 = vmul.f32 %v449, %v467
        %v502 = vmul.f32 %v434, %v468
        %v503 = vmul.f32 %v435, %v468
        %v504 = vmul.f32 %v436, %v468
        %v505 = vmul.f32 %v437, %v468
        %v506 = vmul.f32 %v438, %v468
        %v507 = vmul.f32 %v439, %v468
        %v508 = vmul.f32 %v440, %v468
        %v509 = vmul.f32 %v441, %v468
        %v510 = vmul.f32 %v442, %v468
        %v511 = vmul.f32 %v443, %v468
        %v512 = vmul.f32 %v444, %v468
        %v513 = vmul.f32 %v445, %v468
        %v514 = vmul.f32 %v446, %v468
        %v515 = vmul.f32 %v447, %v468
        %v516 = vmul.f32 %v448, %v468
        %v517 = vmul.f32 %v449, %v468
        %v518 = vmul.f32 %v434, %v469
        %v519 = vmul.f32 %v435, %v469
        %v520 = vmul.f32 %v436, %v469
        %v521 = vmul.f32 %v437, %v469
        %v522 = vmul.f32 %v438, %v469
        %v523 = vmul.f32 %v439, %v469
        %v524 = vmul.f32 %v440, %v469
        %v525 = vmul.f32 %v441, %v469
        %v526 = vmul.f32 %v442, %v469
        %v527 = vmul.f32 %v443, %v469
        %v528 = vmul.f32 %v444, %v469
        %v529 = vmul.f32 %v445, %v469
        %v530 = vmul.f32 %v446, %v469
        %v531 = vmul.f32 %v447, %v469
        %v532 = vmul.f32 %v448, %v469
        %v533 = vmul.f32 %v449, %v469
        %v534 = vmul.f32 %v450, %v466
        %v535 = vmul.f32 %v451, %v466
        %v536 = vmul.f32 %v452, %v466
        %v537 = vmul.f32 %v453, %v466
        %v538 = vmul.f32 %v454, %v466
        %v539 = vmul.f32 %v455, %v466
        %v540 = vmul.f32 %v456, %v466
        %v541 = vmul.f32 %v457, %v466
        %v542 = vmul.f32 %v458, %v466
        %v543 = vmul.f32 %v459, %v466
        %v544 = vmul.f32 %v460, %v466
        %v545 = vmul.f32 %v461, %v466
        %v546 = vmul.f32 %v462, %v466
        %v547 = vmul.f32 %v463, %v466
        %v548 = vmul.f32 %v464, %v466
        %v549 = vmul.f32 %v465, %v466
        %v550 = vmul.f32 %v450, %v467
        %v551 = vmul.f32 %v451, %v467
        %v552 = vmul.f32 %v452, %v467
        %v553 = vmul.f32 %v453, %v467
        %v554 = vmul.f32 %v454, %v467
        %v555 = vmul.f32 %v455, %v467
        %v556 = vmul.f32 %v456, %v467
        %v557 = vmul.f32 %v457, %v467
        %v558 = vmul.f32 %v458, %v467
        %v559 = vmul.f32 %v459, %v467
        %v560 = vmul.f32 %v460, %v467
        %v561 = vmul.f32 %v461, %v467
        %v562 = vmul.f32 %v462, %v467
        %v563 = vmul.f32 %v463, %v467
        %v564 = vmul.f32 %v464, %v467
        %v565 = vmul.f32 %v465, %v467
        %v566 = vmul.f32 %v450, %v468
        %v567 = vmul.f32 %v451, %v468
        %v568 = vmul.f32 %v452, %v468
        %v569 = vmul.f32 %v453, %v468
        %v570 = vmul.f32 %v454, %v468
        %v571 = vmul.f32 %v455, %v468
        %v572 = vmul.f32 %v456, %v468
        %v573 = vmul.f32 %v457, %v468
        %v574 = vmul.f32 %v458, %v468
        %v575 = vmul.f32 %v459, %v468
        %v576 = vmul.f32 %v460, %v468
        %v577 = vmul.f32 %v461, %v468
        %v578 = vmul.f32 %v462, %v468
        %v579 = vmul.f32 %v463, %v468
        %v580 = vmul.f32 %v464, %v468
        %v581 = vmul.f32 %v465, %v468
        %v582 = vmul.f32 %v450, %v469
        %v583 = vmul.f32 %v451, %v469
        %v584 = vmul.f32 %v452, %v469
        %v585 = vmul.f32 %v453, %v469
        %v586 = vmul.f32 %v454, %v469
        %v587 = vmul.f32 %v455, %v469
        %v588 = vmul.f32 %v456, %v469
        %v589 = vmul.f32 %v457, %v469
        %v590 = vmul.f32 %v458, %v469
        %v591 = vmul.f32 %v459, %v469
        %v592 = vmul.f32 %v460, %v469
        %v593 = vmul.f32 %v461, %v469
        %v594 = vmul.f32 %v462, %v469
        %v595 = vmul.f32 %v463, %v469
        %v596 = vmul.f32 %v464, %v469
        %v597 = vmul.f32 %v465, %v469
        %v598 = vpack.c.bf16 %v470, %v470
        %v599 = vpack.c.bf16 %v471, %v471
        %v600 = vpack.c.bf16 %v472, %v472
        %v601 = vpack.c.bf16 %v473, %v473
        %v602 = vpack.c.bf16 %v474, %v474
        %v603 = vpack.c.bf16 %v475, %v475
        %v604 = vpack.c.bf16 %v476, %v476
        %v605 = vpack.c.bf16 %v477, %v477
        %v606 = vpack.c.bf16 %v478, %v478
        %v607 = vpack.c.bf16 %v479, %v479
        %v608 = vpack.c.bf16 %v480, %v480
        %v609 = vpack.c.bf16 %v481, %v481
        %v610 = vpack.c.bf16 %v482, %v482
        %v611 = vpack.c.bf16 %v483, %v483
        %v612 = vpack.c.bf16 %v484, %v484
        %v613 = vpack.c.bf16 %v485, %v485
        %v614 = vpack.c.bf16 %v486, %v486
        %v615 = vpack.c.bf16 %v487, %v487
        %v616 = vpack.c.bf16 %v488, %v488
        %v617 = vpack.c.bf16 %v489, %v489
        %v618 = vpack.c.bf16 %v490, %v490
        %v619 = vpack.c.bf16 %v491, %v491
        %v620 = vpack.c.bf16 %v492, %v492
        %v621 = vpack.c.bf16 %v493, %v493
        %v622 = vpack.c.bf16 %v494, %v494
        %v623 = vpack.c.bf16 %v495, %v495
        %v624 = vpack.c.bf16 %v496, %v496
        %v625 = vpack.c.bf16 %v497, %v497
        %v626 = vpack.c.bf16 %v498, %v498
        %v627 = vpack.c.bf16 %v499, %v499
        %v628 = vpack.c.bf16 %v500, %v500
        %v629 = vpack.c.bf16 %v501, %v501
        %v630 = vpack.c.bf16 %v502, %v502
        %v631 = vpack.c.bf16 %v503, %v503
        %v632 = vpack.c.bf16 %v504, %v504
        %v633 = vpack.c.bf16 %v505, %v505
        %v634 = vpack.c.bf16 %v506, %v506
        %v635 = vpack.c.bf16 %v507, %v507
        %v636 = vpack.c.bf16 %v508, %v508
        %v637 = vpack.c.bf16 %v509, %v509
        %v638 = vpack.c.bf16 %v510, %v510
        %v639 = vpack.c.bf16 %v511, %v511
        %v640 = vpack.c.bf16 %v512, %v512
        %v641 = vpack.c.bf16 %v513, %v513
        %v642 = vpack.c.bf16 %v514, %v514
        %v643 = vpack.c.bf16 %v515, %v515
        %v644 = vpack.c.bf16 %v516, %v516
        %v645 = vpack.c.bf16 %v517, %v517
        %v646 = vpack.c.bf16 %v518, %v518
        %v647 = vpack.c.bf16 %v519, %v519
        %v648 = vpack.c.bf16 %v520, %v520
        %v649 = vpack.c.bf16 %v521, %v521
        %v650 = vpack.c.bf16 %v522, %v522
        %v651 = vpack.c.bf16 %v523, %v523
        %v652 = vpack.c.bf16 %v524, %v524
        %v653 = vpack.c.bf16 %v525, %v525
        %v654 = vpack.c.bf16 %v526, %v526
        %v655 = vpack.c.bf16 %v527, %v527
        %v656 = vpack.c.bf16 %v528, %v528
        %v657 = vpack.c.bf16 %v529, %v529
        %v658 = vpack.c.bf16 %v530, %v530
        %v659 = vpack.c.bf16 %v531, %v531
        %v660 = vpack.c.bf16 %v532, %v532
        %v661 = vpack.c.bf16 %v533, %v533
        %v662 = vpack.c.bf16 %v534, %v534
        %v663 = vpack.c.bf16 %v535, %v535
        %v664 = vpack.c.bf16 %v536, %v536
        %v665 = vpack.c.bf16 %v537, %v537
        %v666 = vpack.c.bf16 %v538, %v538
        %v667 = vpack.c.bf16 %v539, %v539
        %v668 = vpack.c.bf16 %v540, %v540
        %v669 = vpack.c.bf16 %v541, %v541
        %v670 = vpack.c.bf16 %v542, %v542
        %v671 = vpack.c.bf16 %v543, %v543
        %v672 = vpack.c.bf16 %v544, %v544
        %v673 = vpack.c.bf16 %v545, %v545
        %v674 = vpack.c.bf16 %v546, %v546
        %v675 = vpack.c.bf16 %v547, %v547
        %v676 = vpack.c.bf16 %v548, %v548
        %v677 = vpack.c.bf16 %v549, %v549
        %v678 = vpack.c.bf16 %v550, %v550
        %v679 = vpack.c.bf16 %v551, %v551
        %v680 = vpack.c.bf16 %v552, %v552
        %v681 = vpack.c.bf16 %v553, %v553
        %v682 = vpack.c.bf16 %v554, %v554
        %v683 = vpack.c.bf16 %v555, %v555
        %v684 = vpack.c.bf16 %v556, %v556
        %v685 = vpack.c.bf16 %v557, %v557
        %v686 = vpack.c.bf16 %v558, %v558
        %v687 = vpack.c.bf16 %v559, %v559
        %v688 = vpack.c.bf16 %v560, %v560
        %v689 = vpack.c.bf16 %v561, %v561
        %v690 = vpack.c.bf16 %v562, %v562
        %v691 = vpack.c.bf16 %v563, %v563
        %v692 = vpack.c.bf16 %v564, %v564
        %v693 = vpack.c.bf16 %v565, %v565
        %v694 = vpack.c.bf16 %v566, %v566
        %v695 = vpack.c.bf16 %v567, %v567
        %v696 = vpack.c.bf16 %v568, %v568
        %v697 = vpack.c.bf16 %v569, %v569
        %v698 = vpack.c.bf16 %v570, %v570
        %v699 = vpack.c.bf16 %v571, %v571
        %v700 = vpack.c.bf16 %v572, %v572
        %v701 = vpack.c.bf16 %v573, %v573
        %v702 = vpack.c.bf16 %v574, %v574
        %v703 = vpack.c.bf16 %v575, %v575
        %v704 = vpack.c.bf16 %v576, %v576
        %v705 = vpack.c.bf16 %v577, %v577
        %v706 = vpack.c.bf16 %v578, %v578
        %v707 = vpack.c.bf16 %v579, %v579
        %v708 = vpack.c.bf16 %v580, %v580
        %v709 = vpack.c.bf16 %v581, %v581
        %v710 = vpack.c.bf16 %v582, %v582
        %v711 = vpack.c.bf16 %v583, %v583
        %v712 = vpack.c.bf16 %v584, %v584
        %v713 = vpack.c.bf16 %v585, %v585
        %v714 = vpack.c.bf16 %v586, %v586
        %v715 = vpack.c.bf16 %v587, %v587
        %v716 = vpack.c.bf16 %v588, %v588
        %v717 = vpack.c.bf16 %v589, %v589
        %v718 = vpack.c.bf16 %v590, %v590
        %v719 = vpack.c.bf16 %v591, %v591
        %v720 = vpack.c.bf16 %v592, %v592
        %v721 = vpack.c.bf16 %v593, %v593
        %v722 = vpack.c.bf16 %v594, %v594
        %v723 = vpack.c.bf16 %v595, %v595
        %v724 = vpack.c.bf16 %v596, %v596
        %v725 = vpack.c.bf16 %v597, %v597
        %v790 = vunpack.c.l.b16 %v598
        %v791 = vunpack.c.l.b16 %v599
        %v792 = vunpack.c.l.b16 %v600
        %v793 = vunpack.c.l.b16 %v601
        %v794 = vunpack.c.l.b16 %v602
        %v795 = vunpack.c.l.b16 %v603
        %v796 = vunpack.c.l.b16 %v604
        %v797 = vunpack.c.l.b16 %v605
        %v798 = vunpack.c.l.b16 %v606
        %v799 = vunpack.c.l.b16 %v607
        %v800 = vunpack.c.l.b16 %v608
        %v801 = vunpack.c.l.b16 %v609
        %v802 = vunpack.c.l.b16 %v610
        %v803 = vunpack.c.l.b16 %v611
        %v804 = vunpack.c.l.b16 %v612
        %v805 = vunpack.c.l.b16 %v613
        %v806 = vunpack.c.l.b16 %v614
        %v807 = vunpack.c.l.b16 %v615
        %v808 = vunpack.c.l.b16 %v616
        %v809 = vunpack.c.l.b16 %v617
        %v810 = vunpack.c.l.b16 %v618
        %v811 = vunpack.c.l.b16 %v619
        %v812 = vunpack.c.l.b16 %v620
        %v813 = vunpack.c.l.b16 %v621
        %v814 = vunpack.c.l.b16 %v622
        %v815 = vunpack.c.l.b16 %v623
        %v816 = vunpack.c.l.b16 %v624
        %v817 = vunpack.c.l.b16 %v625
        %v818 = vunpack.c.l.b16 %v626
        %v819 = vunpack.c.l.b16 %v627
        %v820 = vunpack.c.l.b16 %v628
        %v821 = vunpack.c.l.b16 %v629
        %v822 = vunpack.c.l.b16 %v630
        %v823 = vunpack.c.l.b16 %v631
        %v824 = vunpack.c.l.b16 %v632
        %v825 = vunpack.c.l.b16 %v633
        %v826 = vunpack.c.l.b16 %v634
        %v827 = vunpack.c.l.b16 %v635
        %v828 = vunpack.c.l.b16 %v636
        %v829 = vunpack.c.l.b16 %v637
        %v830 = vunpack.c.l.b16 %v638
        %v831 = vunpack.c.l.b16 %v639
        %v832 = vunpack.c.l.b16 %v640
        %v833 = vunpack.c.l.b16 %v641
        %v834 = vunpack.c.l.b16 %v642
        %v835 = vunpack.c.l.b16 %v643
        %v836 = vunpack.c.l.b16 %v644
        %v837 = vunpack.c.l.b16 %v645
        %v838 = vunpack.c.l.b16 %v646
        %v839 = vunpack.c.l.b16 %v647
        %v840 = vunpack.c.l.b16 %v648
        %v841 = vunpack.c.l.b16 %v649
        %v842 = vunpack.c.l.b16 %v650
        %v843 = vunpack.c.l.b16 %v651
        %v844 = vunpack.c.l.b16 %v652
        %v845 = vunpack.c.l.b16 %v653
        %v846 = vunpack.c.l.b16 %v654
        %v847 = vunpack.c.l.b16 %v655
        %v848 = vunpack.c.l.b16 %v656
        %v849 = vunpack.c.l.b16 %v657
        %v850 = vunpack.c.l.b16 %v658
        %v851 = vunpack.c.l.b16 %v659
        %v852 = vunpack.c.l.b16 %v660
        %v853 = vunpack.c.l.b16 %v661
        %v854 = vpack.c.b16 %v791, %v790
        %v855 = vpack.c.b16 %v793, %v792
        %v856 = vpack.c.b16 %v795, %v794
        %v857 = vpack.c.b16 %v797, %v796
        %v858 = vpack.c.b16 %v799, %v798
        %v859 = vpack.c.b16 %v801, %v800
        %v860 = vpack.c.b16 %v803, %v802
        %v861 = vpack.c.b16 %v805, %v804
        %v862 = vpack.c.b16 %v807, %v806
        %v863 = vpack.c.b16 %v809, %v808
        %v864 = vpack.c.b16 %v811, %v810
        %v865 = vpack.c.b16 %v813, %v812
        %v866 = vpack.c.b16 %v815, %v814
        %v867 = vpack.c.b16 %v817, %v816
        %v868 = vpack.c.b16 %v819, %v818
        %v869 = vpack.c.b16 %v821, %v820
        %v870 = vpack.c.b16 %v823, %v822
        %v871 = vpack.c.b16 %v825, %v824
        %v872 = vpack.c.b16 %v827, %v826
        %v873 = vpack.c.b16 %v829, %v828
        %v874 = vpack.c.b16 %v831, %v830
        %v875 = vpack.c.b16 %v833, %v832
        %v876 = vpack.c.b16 %v835, %v834
        %v877 = vpack.c.b16 %v837, %v836
        %v878 = vpack.c.b16 %v839, %v838
        %v879 = vpack.c.b16 %v841, %v840
        %v880 = vpack.c.b16 %v843, %v842
        %v881 = vpack.c.b16 %v845, %v844
        %v882 = vpack.c.b16 %v847, %v846
        %v883 = vpack.c.b16 %v849, %v848
        %v884 = vpack.c.b16 %v851, %v850
        %v885 = vpack.c.b16 %v853, %v852
        %v934 = vunpack.c.l.b16 %v319
        %v935 = vunpack.c.l.b16 %v320
        %v936 = vunpack.c.l.b16 %v321
        %v937 = vunpack.c.l.b16 %v322
        %v938 = vunpack.c.l.b16 %v323
        %v939 = vunpack.c.l.b16 %v324
        %v940 = vunpack.c.l.b16 %v325
        %v941 = vunpack.c.l.b16 %v326
        %v942 = vunpack.c.l.b16 %v327
        %v943 = vunpack.c.l.b16 %v328
        %v944 = vunpack.c.l.b16 %v329
        %v945 = vunpack.c.l.b16 %v330
        %v946 = vunpack.c.l.b16 %v331
        %v947 = vunpack.c.l.b16 %v332
        %v948 = vunpack.c.l.b16 %v333
        %v949 = vunpack.c.l.b16 %v334
        %v950 = vpack.c.b16 %v935, %v934
        %v951 = vpack.c.b16 %v937, %v936
        %v952 = vpack.c.b16 %v939, %v938
        %v953 = vpack.c.b16 %v941, %v940
        %v954 = vpack.c.b16 %v943, %v942
        %v955 = vpack.c.b16 %v945, %v944
        %v956 = vpack.c.b16 %v947, %v946
        %v957 = vpack.c.b16 %v949, %v948
        %966 = vmatpush.bf16.xpose.msra.mxu0 %v957
        %967 = vmatpush.bf16.xpose.msra.mxu0 %v956
        %968 = vmatpush.bf16.xpose.msra.mxu0 %v955
        %969 = vmatpush.bf16.xpose.msra.mxu0 %v954
        %970 = vmatpush.bf16.xpose.msra.mxu0 %v953
        %971 = vmatpush.bf16.xpose.msra.mxu0 %v952
        %972 = vmatpush.bf16.xpose.msra.mxu0 %v951
        %973 = vmatpush.bf16.xpose.msra.mxu0 %v950
        %974 = vmatmul.bf16.gmra.mxu0 %v854
        %v975 = vpop.f32.mrf.mxu0
        %v976 = vadd.f32 0.0, %v975
        %v977 = vpop.f32.mrf.mxu0
        %v978 = vadd.f32 0.0, %v977
        %979 = vmatmul.bf16.gmra.mxu0 %v855
        %v980 = vpop.f32.mrf.mxu0
        %v981 = vadd.f32 0.0, %v980
        %v982 = vpop.f32.mrf.mxu0
        %v983 = vadd.f32 0.0, %v982
        %984 = vmatmul.bf16.gmra.mxu0 %v856
        %v985 = vpop.f32.mrf.mxu0
        %v986 = vadd.f32 0.0, %v985
        %v987 = vpop.f32.mrf.mxu0
        %v988 = vadd.f32 0.0, %v987
        %989 = vmatmul.bf16.gmra.mxu0 %v857
        %v990 = vpop.f32.mrf.mxu0
        %v991 = vadd.f32 0.0, %v990
        %v992 = vpop.f32.mrf.mxu0
        %v993 = vadd.f32 0.0, %v992
        %994 = vmatmul.bf16.gmra.mxu0 %v858
        %v995 = vpop.f32.mrf.mxu0
        %v996 = vadd.f32 0.0, %v995
        %v997 = vpop.f32.mrf.mxu0
        %v998 = vadd.f32 0.0, %v997
        %999 = vmatmul.bf16.gmra.mxu0 %v859
        %v1000 = vpop.f32.mrf.mxu0
        %v1001 = vadd.f32 0.0, %v1000
        %v1002 = vpop.f32.mrf.mxu0
        %v1003 = vadd.f32 0.0, %v1002
        %1004 = vmatmul.bf16.gmra.mxu0 %v860
        %v1005 = vpop.f32.mrf.mxu0
        %v1006 = vadd.f32 0.0, %v1005
        %v1007 = vpop.f32.mrf.mxu0
        %v1008 = vadd.f32 0.0, %v1007
        %1009 = vmatmul.bf16.gmra.mxu0 %v861
        %v1010 = vpop.f32.mrf.mxu0
        %v1011 = vadd.f32 0.0, %v1010
        %v1012 = vpop.f32.mrf.mxu0
        %v1013 = vadd.f32 0.0, %v1012
        %1014 = vmatmul.bf16.gmra.mxu0 %v862
        %v1015 = vpop.f32.mrf.mxu0
        %v1016 = vadd.f32 0.0, %v1015
        %v1017 = vpop.f32.mrf.mxu0
        %v1018 = vadd.f32 0.0, %v1017
        %1019 = vmatmul.bf16.gmra.mxu0 %v863
        %v1020 = vpop.f32.mrf.mxu0
        %v1021 = vadd.f32 0.0, %v1020
        %v1022 = vpop.f32.mrf.mxu0
        %v1023 = vadd.f32 0.0, %v1022
        %1024 = vmatmul.bf16.gmra.mxu0 %v864
        %v1025 = vpop.f32.mrf.mxu0
        %v1026 = vadd.f32 0.0, %v1025
        %v1027 = vpop.f32.mrf.mxu0
        %v1028 = vadd.f32 0.0, %v1027
        %1029 = vmatmul.bf16.gmra.mxu0 %v865
        %v1030 = vpop.f32.mrf.mxu0
        %v1031 = vadd.f32 0.0, %v1030
        %v1032 = vpop.f32.mrf.mxu0
        %v1033 = vadd.f32 0.0, %v1032
        %1034 = vmatmul.bf16.gmra.mxu0 %v866
        %v1035 = vpop.f32.mrf.mxu0
        %v1036 = vadd.f32 0.0, %v1035
        %v1037 = vpop.f32.mrf.mxu0
        %v1038 = vadd.f32 0.0, %v1037
        %1039 = vmatmul.bf16.gmra.mxu0 %v867
        %v1040 = vpop.f32.mrf.mxu0
        %v1041 = vadd.f32 0.0, %v1040
        %v1042 = vpop.f32.mrf.mxu0
        %v1043 = vadd.f32 0.0, %v1042
        %1044 = vmatmul.bf16.gmra.mxu0 %v868
        %v1045 = vpop.f32.mrf.mxu0
        %v1046 = vadd.f32 0.0, %v1045
        %v1047 = vpop.f32.mrf.mxu0
        %v1048 = vadd.f32 0.0, %v1047
        %1049 = vmatmul.bf16.gmra.mxu0 %v869
        %v1050 = vpop.f32.mrf.mxu0
        %v1051 = vadd.f32 0.0, %v1050
        %v1052 = vpop.f32.mrf.mxu0
        %v1053 = vadd.f32 0.0, %v1052
        %1054 = vmatmul.bf16.gmra.mxu0 %v870
        %v1055 = vpop.f32.mrf.mxu0
        %v1056 = vadd.f32 0.0, %v1055
        %v1057 = vpop.f32.mrf.mxu0
        %v1058 = vadd.f32 0.0, %v1057
        %1059 = vmatmul.bf16.gmra.mxu0 %v871
        %v1060 = vpop.f32.mrf.mxu0
        %v1061 = vadd.f32 0.0, %v1060
        %v1062 = vpop.f32.mrf.mxu0
        %v1063 = vadd.f32 0.0, %v1062
        %1064 = vmatmul.bf16.gmra.mxu0 %v872
        %v1065 = vpop.f32.mrf.mxu0
        %v1066 = vadd.f32 0.0, %v1065
        %v1067 = vpop.f32.mrf.mxu0
        %v1068 = vadd.f32 0.0, %v1067
        %1069 = vmatmul.bf16.gmra.mxu0 %v873
        %v1070 = vpop.f32.mrf.mxu0
        %v1071 = vadd.f32 0.0, %v1070
        %v1072 = vpop.f32.mrf.mxu0
        %v1073 = vadd.f32 0.0, %v1072
        %1074 = vmatmul.bf16.gmra.mxu0 %v874
        %v1075 = vpop.f32.mrf.mxu0
        %v1076 = vadd.f32 0.0, %v1075
        %v1077 = vpop.f32.mrf.mxu0
        %v1078 = vadd.f32 0.0, %v1077
        %1079 = vmatmul.bf16.gmra.mxu0 %v875
        %v1080 = vpop.f32.mrf.mxu0
        %v1081 = vadd.f32 0.0, %v1080
        %v1082 = vpop.f32.mrf.mxu0
        %v1083 = vadd.f32 0.0, %v1082
        %1084 = vmatmul.bf16.gmra.mxu0 %v876
        %v1085 = vpop.f32.mrf.mxu0
        %v1086 = vadd.f32 0.0, %v1085
        %v1087 = vpop.f32.mrf.mxu0
        %v1088 = vadd.f32 0.0, %v1087
        %1089 = vmatmul.bf16.gmra.mxu0 %v877
        %v1090 = vpop.f32.mrf.mxu0
        %v1091 = vadd.f32 0.0, %v1090
        %v1092 = vpop.f32.mrf.mxu0
        %v1093 = vadd.f32 0.0, %v1092
        %1094 = vmatmul.bf16.gmra.mxu0 %v878
        %v1095 = vpop.f32.mrf.mxu0
        %v1096 = vadd.f32 0.0, %v1095
        %v1097 = vpop.f32.mrf.mxu0
        %v1098 = vadd.f32 0.0, %v1097
        %1099 = vmatmul.bf16.gmra.mxu0 %v879
        %v1100 = vpop.f32.mrf.mxu0
        %v1101 = vadd.f32 0.0, %v1100
        %v1102 = vpop.f32.mrf.mxu0
        %v1103 = vadd.f32 0.0, %v1102
        %1104 = vmatmul.bf16.gmra.mxu0 %v880
        %v1105 = vpop.f32.mrf.mxu0
        %v1106 = vadd.f32 0.0, %v1105
        %v1107 = vpop.f32.mrf.mxu0
        %v1108 = vadd.f32 0.0, %v1107
        %1109 = vmatmul.bf16.gmra.mxu0 %v881
        %v1110 = vpop.f32.mrf.mxu0
        %v1111 = vadd.f32 0.0, %v1110
        %v1112 = vpop.f32.mrf.mxu0
        %v1113 = vadd.f32 0.0, %v1112
        %1114 = vmatmul.bf16.gmra.mxu0 %v882
        %v1115 = vpop.f32.mrf.mxu0
        %v1116 = vadd.f32 0.0, %v1115
        %v1117 = vpop.f32.mrf.mxu0
        %v1118 = vadd.f32 0.0, %v1117
        %1119 = vmatmul.bf16.gmra.mxu0 %v883
        %v1120 = vpop.f32.mrf.mxu0
        %v1121 = vadd.f32 0.0, %v1120
        %v1122 = vpop.f32.mrf.mxu0
        %v1123 = vadd.f32 0.0, %v1122
        %1124 = vmatmul.bf16.gmra.mxu0 %v884
        %v1125 = vpop.f32.mrf.mxu0
        %v1126 = vadd.f32 0.0, %v1125
        %v1127 = vpop.f32.mrf.mxu0
        %v1128 = vadd.f32 0.0, %v1127
        %1129 = vmatmul.bf16.gmra.mxu0 %v885
        %v1130 = vpop.f32.mrf.mxu0
        %v1131 = vadd.f32 0.0, %v1130
        %v1132 = vpop.f32.mrf.mxu0
        %v1133 = vadd.f32 0.0, %v1132
        %1134 = vdwg.mxu0
        %v1199 = vunpack.c.l.b16 %v662
        %v1200 = vunpack.c.l.b16 %v663
        %v1201 = vunpack.c.l.b16 %v664
        %v1202 = vunpack.c.l.b16 %v665
        %v1203 = vunpack.c.l.b16 %v666
        %v1204 = vunpack.c.l.b16 %v667
        %v1205 = vunpack.c.l.b16 %v668
        %v1206 = vunpack.c.l.b16 %v669
        %v1207 = vunpack.c.l.b16 %v670
        %v1208 = vunpack.c.l.b16 %v671
        %v1209 = vunpack.c.l.b16 %v672
        %v1210 = vunpack.c.l.b16 %v673
        %v1211 = vunpack.c.l.b16 %v674
        %v1212 = vunpack.c.l.b16 %v675
        %v1213 = vunpack.c.l.b16 %v676
        %v1214 = vunpack.c.l.b16 %v677
        %v1215 = vunpack.c.l.b16 %v678
        %v1216 = vunpack.c.l.b16 %v679
        %v1217 = vunpack.c.l.b16 %v680
        %v1218 = vunpack.c.l.b16 %v681
        %v1219 = vunpack.c.l.b16 %v682
        %v1220 = vunpack.c.l.b16 %v683
        %v1221 = vunpack.c.l.b16 %v684
        %v1222 = vunpack.c.l.b16 %v685
        %v1223 = vunpack.c.l.b16 %v686
        %v1224 = vunpack.c.l.b16 %v687
        %v1225 = vunpack.c.l.b16 %v688
        %v1226 = vunpack.c.l.b16 %v689
        %v1227 = vunpack.c.l.b16 %v690
        %v1228 = vunpack.c.l.b16 %v691
        %v1229 = vunpack.c.l.b16 %v692
        %v1230 = vunpack.c.l.b16 %v693
        %v1231 = vunpack.c.l.b16 %v694
        %v1232 = vunpack.c.l.b16 %v695
        %v1233 = vunpack.c.l.b16 %v696
        %v1234 = vunpack.c.l.b16 %v697
        %v1235 = vunpack.c.l.b16 %v698
        %v1236 = vunpack.c.l.b16 %v699
        %v1237 = vunpack.c.l.b16 %v700
        %v1238 = vunpack.c.l.b16 %v701
        %v1239 = vunpack.c.l.b16 %v702
        %v1240 = vunpack.c.l.b16 %v703
        %v1241 = vunpack.c.l.b16 %v704
        %v1242 = vunpack.c.l.b16 %v705
        %v1243 = vunpack.c.l.b16 %v706
        %v1244 = vunpack.c.l.b16 %v707
        %v1245 = vunpack.c.l.b16 %v708
        %v1246 = vunpack.c.l.b16 %v709
        %v1247 = vunpack.c.l.b16 %v710
        %v1248 = vunpack.c.l.b16 %v711
        %v1249 = vunpack.c.l.b16 %v712
        %v1250 = vunpack.c.l.b16 %v713
        %v1251 = vunpack.c.l.b16 %v714
        %v1252 = vunpack.c.l.b16 %v715
        %v1253 = vunpack.c.l.b16 %v716
        %v1254 = vunpack.c.l.b16 %v717
        %v1255 = vunpack.c.l.b16 %v718
        %v1256 = vunpack.c.l.b16 %v719
        %v1257 = vunpack.c.l.b16 %v720
        %v1258 = vunpack.c.l.b16 %v721
        %v1259 = vunpack.c.l.b16 %v722
        %v1260 = vunpack.c.l.b16 %v723
        %v1261 = vunpack.c.l.b16 %v724
        %v1262 = vunpack.c.l.b16 %v725
        %v1263 = vpack.c.b16 %v1200, %v1199
        %v1264 = vpack.c.b16 %v1202, %v1201
        %v1265 = vpack.c.b16 %v1204, %v1203
        %v1266 = vpack.c.b16 %v1206, %v1205
        %v1267 = vpack.c.b16 %v1208, %v1207
        %v1268 = vpack.c.b16 %v1210, %v1209
        %v1269 = vpack.c.b16 %v1212, %v1211
        %v1270 = vpack.c.b16 %v1214, %v1213
        %v1271 = vpack.c.b16 %v1216, %v1215
        %v1272 = vpack.c.b16 %v1218, %v1217
        %v1273 = vpack.c.b16 %v1220, %v1219
        %v1274 = vpack.c.b16 %v1222, %v1221
        %v1275 = vpack.c.b16 %v1224, %v1223
        %v1276 = vpack.c.b16 %v1226, %v1225
        %v1277 = vpack.c.b16 %v1228, %v1227
        %v1278 = vpack.c.b16 %v1230, %v1229
        %v1279 = vpack.c.b16 %v1232, %v1231
        %v1280 = vpack.c.b16 %v1234, %v1233
        %v1281 = vpack.c.b16 %v1236, %v1235
        %v1282 = vpack.c.b16 %v1238, %v1237
        %v1283 = vpack.c.b16 %v1240, %v1239
        %v1284 = vpack.c.b16 %v1242, %v1241
        %v1285 = vpack.c.b16 %v1244, %v1243
        %v1286 = vpack.c.b16 %v1246, %v1245
        %v1287 = vpack.c.b16 %v1248, %v1247
        %v1288 = vpack.c.b16 %v1250, %v1249
        %v1289 = vpack.c.b16 %v1252, %v1251
        %v1290 = vpack.c.b16 %v1254, %v1253
        %v1291 = vpack.c.b16 %v1256, %v1255
        %v1292 = vpack.c.b16 %v1258, %v1257
        %v1293 = vpack.c.b16 %v1260, %v1259
        %v1294 = vpack.c.b16 %v1262, %v1261
        %v1343 = vunpack.c.l.b16 %v335
        %v1344 = vunpack.c.l.b16 %v336
        %v1345 = vunpack.c.l.b16 %v337
        %v1346 = vunpack.c.l.b16 %v338
        %v1347 = vunpack.c.l.b16 %v339
        %v1348 = vunpack.c.l.b16 %v340
        %v1349 = vunpack.c.l.b16 %v341
        %v1350 = vunpack.c.l.b16 %v342
        %v1351 = vunpack.c.l.b16 %v343
        %v1352 = vunpack.c.l.b16 %v344
        %v1353 = vunpack.c.l.b16 %v345
        %v1354 = vunpack.c.l.b16 %v346
        %v1355 = vunpack.c.l.b16 %v347
        %v1356 = vunpack.c.l.b16 %v348
        %v1357 = vunpack.c.l.b16 %v349
        %v1358 = vunpack.c.l.b16 %v350
        %v1359 = vpack.c.b16 %v1344, %v1343
        %v1360 = vpack.c.b16 %v1346, %v1345
        %v1361 = vpack.c.b16 %v1348, %v1347
        %v1362 = vpack.c.b16 %v1350, %v1349
        %v1363 = vpack.c.b16 %v1352, %v1351
        %v1364 = vpack.c.b16 %v1354, %v1353
        %v1365 = vpack.c.b16 %v1356, %v1355
        %v1366 = vpack.c.b16 %v1358, %v1357
        %1375 = vmatpush.bf16.xpose.msra.mxu0 %v1366
        %1376 = vmatpush.bf16.xpose.msra.mxu0 %v1365
        %1377 = vmatpush.bf16.xpose.msra.mxu0 %v1364
        %1378 = vmatpush.bf16.xpose.msra.mxu0 %v1363
        %1379 = vmatpush.bf16.xpose.msra.mxu0 %v1362
        %1380 = vmatpush.bf16.xpose.msra.mxu0 %v1361
        %1381 = vmatpush.bf16.xpose.msra.mxu0 %v1360
        %1382 = vmatpush.bf16.xpose.msra.mxu0 %v1359
        %1383 = vmatmul.bf16.gmra.mxu0 %v1263
        %v1384 = vpop.f32.mrf.mxu0
        %v1385 = vadd.f32 0.0, %v1384
        %v1386 = vpop.f32.mrf.mxu0
        %v1387 = vadd.f32 0.0, %v1386
        %1388 = vmatmul.bf16.gmra.mxu0 %v1264
        %v1389 = vpop.f32.mrf.mxu0
        %v1390 = vadd.f32 0.0, %v1389
        %v1391 = vpop.f32.mrf.mxu0
        %v1392 = vadd.f32 0.0, %v1391
        %1393 = vmatmul.bf16.gmra.mxu0 %v1265
        %v1394 = vpop.f32.mrf.mxu0
        %v1395 = vadd.f32 0.0, %v1394
        %v1396 = vpop.f32.mrf.mxu0
        %v1397 = vadd.f32 0.0, %v1396
        %1398 = vmatmul.bf16.gmra.mxu0 %v1266
        %v1399 = vpop.f32.mrf.mxu0
        %v1400 = vadd.f32 0.0, %v1399
        %v1401 = vpop.f32.mrf.mxu0
        %v1402 = vadd.f32 0.0, %v1401
        %1403 = vmatmul.bf16.gmra.mxu0 %v1267
        %v1404 = vpop.f32.mrf.mxu0
        %v1405 = vadd.f32 0.0, %v1404
        %v1406 = vpop.f32.mrf.mxu0
        %v1407 = vadd.f32 0.0, %v1406
        %1408 = vmatmul.bf16.gmra.mxu0 %v1268
        %v1409 = vpop.f32.mrf.mxu0
        %v1410 = vadd.f32 0.0, %v1409
        %v1411 = vpop.f32.mrf.mxu0
        %v1412 = vadd.f32 0.0, %v1411
        %1413 = vmatmul.bf16.gmra.mxu0 %v1269
        %v1414 = vpop.f32.mrf.mxu0
        %v1415 = vadd.f32 0.0, %v1414
        %v1416 = vpop.f32.mrf.mxu0
        %v1417 = vadd.f32 0.0, %v1416
        %1418 = vmatmul.bf16.gmra.mxu0 %v1270
        %v1419 = vpop.f32.mrf.mxu0
        %v1420 = vadd.f32 0.0, %v1419
        %v1421 = vpop.f32.mrf.mxu0
        %v1422 = vadd.f32 0.0, %v1421
        %1423 = vmatmul.bf16.gmra.mxu0 %v1271
        %v1424 = vpop.f32.mrf.mxu0
        %v1425 = vadd.f32 0.0, %v1424
        %v1426 = vpop.f32.mrf.mxu0
        %v1427 = vadd.f32 0.0, %v1426
        %1428 = vmatmul.bf16.gmra.mxu0 %v1272
        %v1429 = vpop.f32.mrf.mxu0
        %v1430 = vadd.f32 0.0, %v1429
        %v1431 = vpop.f32.mrf.mxu0
        %v1432 = vadd.f32 0.0, %v1431
        %1433 = vmatmul.bf16.gmra.mxu0 %v1273
        %v1434 = vpop.f32.mrf.mxu0
        %v1435 = vadd.f32 0.0, %v1434
        %v1436 = vpop.f32.mrf.mxu0
        %v1437 = vadd.f32 0.0, %v1436
        %1438 = vmatmul.bf16.gmra.mxu0 %v1274
        %v1439 = vpop.f32.mrf.mxu0
        %v1440 = vadd.f32 0.0, %v1439
        %v1441 = vpop.f32.mrf.mxu0
        %v1442 = vadd.f32 0.0, %v1441
        %1443 = vmatmul.bf16.gmra.mxu0 %v1275
        %v1444 = vpop.f32.mrf.mxu0
        %v1445 = vadd.f32 0.0, %v1444
        %v1446 = vpop.f32.mrf.mxu0
        %v1447 = vadd.f32 0.0, %v1446
        %1448 = vmatmul.bf16.gmra.mxu0 %v1276
        %v1449 = vpop.f32.mrf.mxu0
        %v1450 = vadd.f32 0.0, %v1449
        %v1451 = vpop.f32.mrf.mxu0
        %v1452 = vadd.f32 0.0, %v1451
        %1453 = vmatmul.bf16.gmra.mxu0 %v1277
        %v1454 = vpop.f32.mrf.mxu0
        %v1455 = vadd.f32 0.0, %v1454
        %v1456 = vpop.f32.mrf.mxu0
        %v1457 = vadd.f32 0.0, %v1456
        %1458 = vmatmul.bf16.gmra.mxu0 %v1278
        %v1459 = vpop.f32.mrf.mxu0
        %v1460 = vadd.f32 0.0, %v1459
        %v1461 = vpop.f32.mrf.mxu0
        %v1462 = vadd.f32 0.0, %v1461
        %1463 = vmatmul.bf16.gmra.mxu0 %v1279
        %v1464 = vpop.f32.mrf.mxu0
        %v1465 = vadd.f32 0.0, %v1464
        %v1466 = vpop.f32.mrf.mxu0
        %v1467 = vadd.f32 0.0, %v1466
        %1468 = vmatmul.bf16.gmra.mxu0 %v1280
        %v1469 = vpop.f32.mrf.mxu0
        %v1470 = vadd.f32 0.0, %v1469
        %v1471 = vpop.f32.mrf.mxu0
        %v1472 = vadd.f32 0.0, %v1471
        %1473 = vmatmul.bf16.gmra.mxu0 %v1281
        %v1474 = vpop.f32.mrf.mxu0
        %v1475 = vadd.f32 0.0, %v1474
        %v1476 = vpop.f32.mrf.mxu0
        %v1477 = vadd.f32 0.0, %v1476
        %1478 = vmatmul.bf16.gmra.mxu0 %v1282
        %v1479 = vpop.f32.mrf.mxu0
        %v1480 = vadd.f32 0.0, %v1479
        %v1481 = vpop.f32.mrf.mxu0
        %v1482 = vadd.f32 0.0, %v1481
        %1483 = vmatmul.bf16.gmra.mxu0 %v1283
        %v1484 = vpop.f32.mrf.mxu0
        %v1485 = vadd.f32 0.0, %v1484
        %v1486 = vpop.f32.mrf.mxu0
        %v1487 = vadd.f32 0.0, %v1486
        %1488 = vmatmul.bf16.gmra.mxu0 %v1284
        %v1489 = vpop.f32.mrf.mxu0
        %v1490 = vadd.f32 0.0, %v1489
        %v1491 = vpop.f32.mrf.mxu0
        %v1492 = vadd.f32 0.0, %v1491
        %1493 = vmatmul.bf16.gmra.mxu0 %v1285
        %v1494 = vpop.f32.mrf.mxu0
        %v1495 = vadd.f32 0.0, %v1494
        %v1496 = vpop.f32.mrf.mxu0
        %v1497 = vadd.f32 0.0, %v1496
        %1498 = vmatmul.bf16.gmra.mxu0 %v1286
        %v1499 = vpop.f32.mrf.mxu0
        %v1500 = vadd.f32 0.0, %v1499
        %v1501 = vpop.f32.mrf.mxu0
        %v1502 = vadd.f32 0.0, %v1501
        %1503 = vmatmul.bf16.gmra.mxu0 %v1287
        %v1504 = vpop.f32.mrf.mxu0
        %v1505 = vadd.f32 0.0, %v1504
        %v1506 = vpop.f32.mrf.mxu0
        %v1507 = vadd.f32 0.0, %v1506
        %1508 = vmatmul.bf16.gmra.mxu0 %v1288
        %v1509 = vpop.f32.mrf.mxu0
        %v1510 = vadd.f32 0.0, %v1509
        %v1511 = vpop.f32.mrf.mxu0
        %v1512 = vadd.f32 0.0, %v1511
        %1513 = vmatmul.bf16.gmra.mxu0 %v1289
        %v1514 = vpop.f32.mrf.mxu0
        %v1515 = vadd.f32 0.0, %v1514
        %v1516 = vpop.f32.mrf.mxu0
        %v1517 = vadd.f32 0.0, %v1516
        %1518 = vmatmul.bf16.gmra.mxu0 %v1290
        %v1519 = vpop.f32.mrf.mxu0
        %v1520 = vadd.f32 0.0, %v1519
        %v1521 = vpop.f32.mrf.mxu0
        %v1522 = vadd.f32 0.0, %v1521
        %1523 = vmatmul.bf16.gmra.mxu0 %v1291
        %v1524 = vpop.f32.mrf.mxu0
        %v1525 = vadd.f32 0.0, %v1524
        %v1526 = vpop.f32.mrf.mxu0
        %v1527 = vadd.f32 0.0, %v1526
        %1528 = vmatmul.bf16.gmra.mxu0 %v1292
        %v1529 = vpop.f32.mrf.mxu0
        %v1530 = vadd.f32 0.0, %v1529
        %v1531 = vpop.f32.mrf.mxu0
        %v1532 = vadd.f32 0.0, %v1531
        %1533 = vmatmul.bf16.gmra.mxu0 %v1293
        %v1534 = vpop.f32.mrf.mxu0
        %v1535 = vadd.f32 0.0, %v1534
        %v1536 = vpop.f32.mrf.mxu0
        %v1537 = vadd.f32 0.0, %v1536
        %1538 = vmatmul.bf16.gmra.mxu0 %v1294
        %v1539 = vpop.f32.mrf.mxu0
        %v1540 = vadd.f32 0.0, %v1539
        %v1541 = vpop.f32.mrf.mxu0
        %v1542 = vadd.f32 0.0, %v1541
        %1543 = vdwg.mxu0
        %vm1544 = vcmp.eq.s32.totalorder %v359, 2
        %vm1545 = vcmp.eq.s32.totalorder %v360, 2
        %vm1546 = vcmp.eq.s32.totalorder %v361, 2
        %vm1547 = vcmp.eq.s32.totalorder %v362, 2
        %vm1548 = vcmp.eq.s32.totalorder %v363, 2
        %vm1549 = vcmp.eq.s32.totalorder %v364, 2
        %vm1550 = vcmp.eq.s32.totalorder %v365, 2
        %vm1551 = vcmp.eq.s32.totalorder %v366, 2
        %vm1552 = vcmp.eq.s32.totalorder %v367, 2
        %vm1553 = vcmp.eq.s32.totalorder %v368, 2
        %vm1554 = vcmp.eq.s32.totalorder %v369, 2
        %vm1555 = vcmp.eq.s32.totalorder %v370, 2
        %vm1556 = vcmp.eq.s32.totalorder %v371, 2
        %vm1557 = vcmp.eq.s32.totalorder %v372, 2
        %vm1558 = vcmp.eq.s32.totalorder %v373, 2
        %vm1559 = vcmp.eq.s32.totalorder %v374, 2
        %vm1560 = vcmp.eq.s32.totalorder %v375, 2
        %vm1561 = vcmp.eq.s32.totalorder %v376, 2
        %vm1562 = vcmp.eq.s32.totalorder %v377, 2
        %vm1563 = vcmp.eq.s32.totalorder %v378, 2
        %vm1564 = vcmp.eq.s32.totalorder %v379, 2
        %vm1565 = vcmp.eq.s32.totalorder %v380, 2
        %vm1566 = vcmp.eq.s32.totalorder %v381, 2
        %vm1567 = vcmp.eq.s32.totalorder %v382, 2
        %vm1568 = vcmp.eq.s32.totalorder %v383, 2
        %vm1569 = vcmp.eq.s32.totalorder %v384, 2
        %vm1570 = vcmp.eq.s32.totalorder %v385, 2
        %vm1571 = vcmp.eq.s32.totalorder %v386, 2
        %vm1572 = vcmp.eq.s32.totalorder %v387, 2
        %vm1573 = vcmp.eq.s32.totalorder %v388, 2
        %vm1574 = vcmp.eq.s32.totalorder %v389, 2
        %vm1575 = vcmp.eq.s32.totalorder %v390, 2
        %v1576 = vsel %vm1544, %v1016, %v976
        %v1577 = vsel %vm1545, %v1018, %v978
        %v1578 = vsel %vm1546, %v1021, %v981
        %v1579 = vsel %vm1547, %v1023, %v983
        %v1580 = vsel %vm1548, %v1026, %v986
        %v1581 = vsel %vm1549, %v1028, %v988
        %v1582 = vsel %vm1550, %v1031, %v991
        %v1583 = vsel %vm1551, %v1033, %v993
        %v1584 = vsel %vm1552, %v1036, %v996
        %v1585 = vsel %vm1553, %v1038, %v998
        %v1586 = vsel %vm1554, %v1041, %v1001
        %v1587 = vsel %vm1555, %v1043, %v1003
        %v1588 = vsel %vm1556, %v1046, %v1006
        %v1589 = vsel %vm1557, %v1048, %v1008
        %v1590 = vsel %vm1558, %v1051, %v1011
        %v1591 = vsel %vm1559, %v1053, %v1013
        %v1592 = vsel %vm1560, %v1425, %v1385
        %v1593 = vsel %vm1561, %v1427, %v1387
        %v1594 = vsel %vm1562, %v1430, %v1390
        %v1595 = vsel %vm1563, %v1432, %v1392
        %v1596 = vsel %vm1564, %v1435, %v1395
        %v1597 = vsel %vm1565, %v1437, %v1397
        %v1598 = vsel %vm1566, %v1440, %v1400
        %v1599 = vsel %vm1567, %v1442, %v1402
        %v1600 = vsel %vm1568, %v1445, %v1405
        %v1601 = vsel %vm1569, %v1447, %v1407
        %v1602 = vsel %vm1570, %v1450, %v1410
        %v1603 = vsel %vm1571, %v1452, %v1412
        %v1604 = vsel %vm1572, %v1455, %v1415
        %v1605 = vsel %vm1573, %v1457, %v1417
        %v1606 = vsel %vm1574, %v1460, %v1420
        %v1607 = vsel %vm1575, %v1462, %v1422
        %vm1608 = vcmp.eq.s32.totalorder %v359, 3
        %vm1609 = vcmp.eq.s32.totalorder %v360, 3
        %vm1610 = vcmp.eq.s32.totalorder %v361, 3
        %vm1611 = vcmp.eq.s32.totalorder %v362, 3
        %vm1612 = vcmp.eq.s32.totalorder %v363, 3
        %vm1613 = vcmp.eq.s32.totalorder %v364, 3
        %vm1614 = vcmp.eq.s32.totalorder %v365, 3
        %vm1615 = vcmp.eq.s32.totalorder %v366, 3
        %vm1616 = vcmp.eq.s32.totalorder %v367, 3
        %vm1617 = vcmp.eq.s32.totalorder %v368, 3
        %vm1618 = vcmp.eq.s32.totalorder %v369, 3
        %vm1619 = vcmp.eq.s32.totalorder %v370, 3
        %vm1620 = vcmp.eq.s32.totalorder %v371, 3
        %vm1621 = vcmp.eq.s32.totalorder %v372, 3
        %vm1622 = vcmp.eq.s32.totalorder %v373, 3
        %vm1623 = vcmp.eq.s32.totalorder %v374, 3
        %vm1624 = vcmp.eq.s32.totalorder %v375, 3
        %vm1625 = vcmp.eq.s32.totalorder %v376, 3
        %vm1626 = vcmp.eq.s32.totalorder %v377, 3
        %vm1627 = vcmp.eq.s32.totalorder %v378, 3
        %vm1628 = vcmp.eq.s32.totalorder %v379, 3
        %vm1629 = vcmp.eq.s32.totalorder %v380, 3
        %vm1630 = vcmp.eq.s32.totalorder %v381, 3
        %vm1631 = vcmp.eq.s32.totalorder %v382, 3
        %vm1632 = vcmp.eq.s32.totalorder %v383, 3
        %vm1633 = vcmp.eq.s32.totalorder %v384, 3
        %vm1634 = vcmp.eq.s32.totalorder %v385, 3
        %vm1635 = vcmp.eq.s32.totalorder %v386, 3
        %vm1636 = vcmp.eq.s32.totalorder %v387, 3
        %vm1637 = vcmp.eq.s32.totalorder %v388, 3
        %vm1638 = vcmp.eq.s32.totalorder %v389, 3
        %vm1639 = vcmp.eq.s32.totalorder %v390, 3
        %v1640 = vsel %vm1608, %v1056, %v1576
        %v1641 = vsel %vm1609, %v1058, %v1577
        %v1642 = vsel %vm1610, %v1061, %v1578
        %v1643 = vsel %vm1611, %v1063, %v1579
        %v1644 = vsel %vm1612, %v1066, %v1580
        %v1645 = vsel %vm1613, %v1068, %v1581
        %v1646 = vsel %vm1614, %v1071, %v1582
        %v1647 = vsel %vm1615, %v1073, %v1583
        %v1648 = vsel %vm1616, %v1076, %v1584
        %v1649 = vsel %vm1617, %v1078, %v1585
        %v1650 = vsel %vm1618, %v1081, %v1586
        %v1651 = vsel %vm1619, %v1083, %v1587
        %v1652 = vsel %vm1620, %v1086, %v1588
        %v1653 = vsel %vm1621, %v1088, %v1589
        %v1654 = vsel %vm1622, %v1091, %v1590
        %v1655 = vsel %vm1623, %v1093, %v1591
        %v1656 = vsel %vm1624, %v1465, %v1592
        %v1657 = vsel %vm1625, %v1467, %v1593
        %v1658 = vsel %vm1626, %v1470, %v1594
        %v1659 = vsel %vm1627, %v1472, %v1595
        %v1660 = vsel %vm1628, %v1475, %v1596
        %v1661 = vsel %vm1629, %v1477, %v1597
        %v1662 = vsel %vm1630, %v1480, %v1598
        %v1663 = vsel %vm1631, %v1482, %v1599
        %v1664 = vsel %vm1632, %v1485, %v1600
        %v1665 = vsel %vm1633, %v1487, %v1601
        %v1666 = vsel %vm1634, %v1490, %v1602
        %v1667 = vsel %vm1635, %v1492, %v1603
        %v1668 = vsel %vm1636, %v1495, %v1604
        %v1669 = vsel %vm1637, %v1497, %v1605
        %v1670 = vsel %vm1638, %v1500, %v1606
        %v1671 = vsel %vm1639, %v1502, %v1607
        %vm1672 = vcmp.eq.s32.totalorder %v359, 4
        %vm1673 = vcmp.eq.s32.totalorder %v360, 4
        %vm1674 = vcmp.eq.s32.totalorder %v361, 4
        %vm1675 = vcmp.eq.s32.totalorder %v362, 4
        %vm1676 = vcmp.eq.s32.totalorder %v363, 4
        %vm1677 = vcmp.eq.s32.totalorder %v364, 4
        %vm1678 = vcmp.eq.s32.totalorder %v365, 4
        %vm1679 = vcmp.eq.s32.totalorder %v366, 4
        %vm1680 = vcmp.eq.s32.totalorder %v367, 4
        %vm1681 = vcmp.eq.s32.totalorder %v368, 4
        %vm1682 = vcmp.eq.s32.totalorder %v369, 4
        %vm1683 = vcmp.eq.s32.totalorder %v370, 4
        %vm1684 = vcmp.eq.s32.totalorder %v371, 4
        %vm1685 = vcmp.eq.s32.totalorder %v372, 4
        %vm1686 = vcmp.eq.s32.totalorder %v373, 4
        %vm1687 = vcmp.eq.s32.totalorder %v374, 4
        %vm1688 = vcmp.eq.s32.totalorder %v375, 4
        %vm1689 = vcmp.eq.s32.totalorder %v376, 4
        %vm1690 = vcmp.eq.s32.totalorder %v377, 4
        %vm1691 = vcmp.eq.s32.totalorder %v378, 4
        %vm1692 = vcmp.eq.s32.totalorder %v379, 4
        %vm1693 = vcmp.eq.s32.totalorder %v380, 4
        %vm1694 = vcmp.eq.s32.totalorder %v381, 4
        %vm1695 = vcmp.eq.s32.totalorder %v382, 4
        %vm1696 = vcmp.eq.s32.totalorder %v383, 4
        %vm1697 = vcmp.eq.s32.totalorder %v384, 4
        %vm1698 = vcmp.eq.s32.totalorder %v385, 4
        %vm1699 = vcmp.eq.s32.totalorder %v386, 4
        %vm1700 = vcmp.eq.s32.totalorder %v387, 4
        %vm1701 = vcmp.eq.s32.totalorder %v388, 4
        %vm1702 = vcmp.eq.s32.totalorder %v389, 4
        %vm1703 = vcmp.eq.s32.totalorder %v390, 4
        %v1704 = vsel %vm1672, %v1096, %v1640
        %v1705 = vsel %vm1673, %v1098, %v1641
        %v1706 = vsel %vm1674, %v1101, %v1642
        %v1707 = vsel %vm1675, %v1103, %v1643
        %v1708 = vsel %vm1676, %v1106, %v1644
        %v1709 = vsel %vm1677, %v1108, %v1645
        %v1710 = vsel %vm1678, %v1111, %v1646
        %v1711 = vsel %vm1679, %v1113, %v1647
        %v1712 = vsel %vm1680, %v1116, %v1648
        %v1713 = vsel %vm1681, %v1118, %v1649
        %v1714 = vsel %vm1682, %v1121, %v1650
        %v1715 = vsel %vm1683, %v1123, %v1651
        %v1716 = vsel %vm1684, %v1126, %v1652
        %v1717 = vsel %vm1685, %v1128, %v1653
        %v1718 = vsel %vm1686, %v1131, %v1654
        %v1719 = vsel %vm1687, %v1133, %v1655
        %v1720 = vsel %vm1688, %v1505, %v1656
        %v1721 = vsel %vm1689, %v1507, %v1657
        %v1722 = vsel %vm1690, %v1510, %v1658
        %v1723 = vsel %vm1691, %v1512, %v1659
        %v1724 = vsel %vm1692, %v1515, %v1660
        %v1725 = vsel %vm1693, %v1517, %v1661
        %v1726 = vsel %vm1694, %v1520, %v1662
        %v1727 = vsel %vm1695, %v1522, %v1663
        %v1728 = vsel %vm1696, %v1525, %v1664
        %v1729 = vsel %vm1697, %v1527, %v1665
        %v1730 = vsel %vm1698, %v1530, %v1666
        %v1731 = vsel %vm1699, %v1532, %v1667
        %v1732 = vsel %vm1700, %v1535, %v1668
        %v1733 = vsel %vm1701, %v1537, %v1669
        %v1734 = vsel %vm1702, %v1540, %v1670
        %v1735 = vsel %vm1703, %v1542, %v1671
        %vm1736 = vcmp.ge.f32.partialorder %v1704, 0.0
        %vm1737 = vcmp.ge.f32.partialorder %v1705, 0.0
        %vm1738 = vcmp.ge.f32.partialorder %v1706, 0.0
        %vm1739 = vcmp.ge.f32.partialorder %v1707, 0.0
        %vm1740 = vcmp.ge.f32.partialorder %v1708, 0.0
        %vm1741 = vcmp.ge.f32.partialorder %v1709, 0.0
        %vm1742 = vcmp.ge.f32.partialorder %v1710, 0.0
        %vm1743 = vcmp.ge.f32.partialorder %v1711, 0.0
        %vm1744 = vcmp.ge.f32.partialorder %v1712, 0.0
        %vm1745 = vcmp.ge.f32.partialorder %v1713, 0.0
        %vm1746 = vcmp.ge.f32.partialorder %v1714, 0.0
        %vm1747 = vcmp.ge.f32.partialorder %v1715, 0.0
        %vm1748 = vcmp.ge.f32.partialorder %v1716, 0.0
        %vm1749 = vcmp.ge.f32.partialorder %v1717, 0.0
        %vm1750 = vcmp.ge.f32.partialorder %v1718, 0.0
        %vm1751 = vcmp.ge.f32.partialorder %v1719, 0.0
        %vm1752 = vcmp.ge.f32.partialorder %v1720, 0.0
        %vm1753 = vcmp.ge.f32.partialorder %v1721, 0.0
        %vm1754 = vcmp.ge.f32.partialorder %v1722, 0.0
        %vm1755 = vcmp.ge.f32.partialorder %v1723, 0.0
        %vm1756 = vcmp.ge.f32.partialorder %v1724, 0.0
        %vm1757 = vcmp.ge.f32.partialorder %v1725, 0.0
        %vm1758 = vcmp.ge.f32.partialorder %v1726, 0.0
        %vm1759 = vcmp.ge.f32.partialorder %v1727, 0.0
        %vm1760 = vcmp.ge.f32.partialorder %v1728, 0.0
        %vm1761 = vcmp.ge.f32.partialorder %v1729, 0.0
        %vm1762 = vcmp.ge.f32.partialorder %v1730, 0.0
        %vm1763 = vcmp.ge.f32.partialorder %v1731, 0.0
        %vm1764 = vcmp.ge.f32.partialorder %v1732, 0.0
        %vm1765 = vcmp.ge.f32.partialorder %v1733, 0.0
        %vm1766 = vcmp.ge.f32.partialorder %v1734, 0.0
        %vm1767 = vcmp.ge.f32.partialorder %v1735, 0.0
        %v1768 = vmul.f32 %v1704, 0.2
        %v1769 = vmul.f32 %v1705, 0.2
        %v1770 = vmul.f32 %v1706, 0.2
        %v1771 = vmul.f32 %v1707, 0.2
        %v1772 = vmul.f32 %v1708, 0.2
        %v1773 = vmul.f32 %v1709, 0.2
        %v1774 = vmul.f32 %v1710, 0.2
        %v1775 = vmul.f32 %v1711, 0.2
        %v1776 = vmul.f32 %v1712, 0.2
        %v1777 = vmul.f32 %v1713, 0.2
        %v1778 = vmul.f32 %v1714, 0.2
        %v1779 = vmul.f32 %v1715, 0.2
        %v1780 = vmul.f32 %v1716, 0.2
        %v1781 = vmul.f32 %v1717, 0.2
        %v1782 = vmul.f32 %v1718, 0.2
        %v1783 = vmul.f32 %v1719, 0.2
        %v1784 = vmul.f32 %v1720, 0.2
        %v1785 = vmul.f32 %v1721, 0.2
        %v1786 = vmul.f32 %v1722, 0.2
        %v1787 = vmul.f32 %v1723, 0.2
        %v1788 = vmul.f32 %v1724, 0.2
        %v1789 = vmul.f32 %v1725, 0.2
        %v1790 = vmul.f32 %v1726, 0.2
        %v1791 = vmul.f32 %v1727, 0.2
        %v1792 = vmul.f32 %v1728, 0.2
        %v1793 = vmul.f32 %v1729, 0.2
        %v1794 = vmul.f32 %v1730, 0.2
        %v1795 = vmul.f32 %v1731, 0.2
        %v1796 = vmul.f32 %v1732, 0.2
        %v1797 = vmul.f32 %v1733, 0.2
        %v1798 = vmul.f32 %v1734, 0.2
        %v1799 = vmul.f32 %v1735, 0.2
        %v1800 = vsel %vm1736, %v1704, %v1768
        %v1801 = vsel %vm1737, %v1705, %v1769
        %v1802 = vsel %vm1738, %v1706, %v1770
        %v1803 = vsel %vm1739, %v1707, %v1771
        %v1804 = vsel %vm1740, %v1708, %v1772
        %v1805 = vsel %vm1741, %v1709, %v1773
        %v1806 = vsel %vm1742, %v1710, %v1774
        %v1807 = vsel %vm1743, %v1711, %v1775
        %v1808 = vsel %vm1744, %v1712, %v1776
        %v1809 = vsel %vm1745, %v1713, %v1777
        %v1810 = vsel %vm1746, %v1714, %v1778
        %v1811 = vsel %vm1747, %v1715, %v1779
        %v1812 = vsel %vm1748, %v1716, %v1780
        %v1813 = vsel %vm1749, %v1717, %v1781
        %v1814 = vsel %vm1750, %v1718, %v1782
        %v1815 = vsel %vm1751, %v1719, %v1783
        %v1816 = vsel %vm1752, %v1720, %v1784
        %v1817 = vsel %vm1753, %v1721, %v1785
        %v1818 = vsel %vm1754, %v1722, %v1786
        %v1819 = vsel %vm1755, %v1723, %v1787
        %v1820 = vsel %vm1756, %v1724, %v1788
        %v1821 = vsel %vm1757, %v1725, %v1789
        %v1822 = vsel %vm1758, %v1726, %v1790
        %v1823 = vsel %vm1759, %v1727, %v1791
        %v1824 = vsel %vm1760, %v1728, %v1792
        %v1825 = vsel %vm1761, %v1729, %v1793
        %v1826 = vsel %vm1762, %v1730, %v1794
        %v1827 = vsel %vm1763, %v1731, %v1795
        %v1828 = vsel %vm1764, %v1732, %v1796
        %v1829 = vsel %vm1765, %v1733, %v1797
        %v1830 = vsel %vm1766, %v1734, %v1798
        %v1831 = vsel %vm1767, %v1735, %v1799
        %vm1832 = vcmp.ge.s32.totalorder %v359, 1
        %vm1833 = vcmp.ge.s32.totalorder %v360, 1
        %vm1834 = vcmp.ge.s32.totalorder %v361, 1
        %vm1835 = vcmp.ge.s32.totalorder %v362, 1
        %vm1836 = vcmp.ge.s32.totalorder %v363, 1
        %vm1837 = vcmp.ge.s32.totalorder %v364, 1
        %vm1838 = vcmp.ge.s32.totalorder %v365, 1
        %vm1839 = vcmp.ge.s32.totalorder %v366, 1
        %vm1840 = vcmp.ge.s32.totalorder %v367, 1
        %vm1841 = vcmp.ge.s32.totalorder %v368, 1
        %vm1842 = vcmp.ge.s32.totalorder %v369, 1
        %vm1843 = vcmp.ge.s32.totalorder %v370, 1
        %vm1844 = vcmp.ge.s32.totalorder %v371, 1
        %vm1845 = vcmp.ge.s32.totalorder %v372, 1
        %vm1846 = vcmp.ge.s32.totalorder %v373, 1
        %vm1847 = vcmp.ge.s32.totalorder %v374, 1
        %vm1848 = vcmp.ge.s32.totalorder %v375, 1
        %vm1849 = vcmp.ge.s32.totalorder %v376, 1
        %vm1850 = vcmp.ge.s32.totalorder %v377, 1
        %vm1851 = vcmp.ge.s32.totalorder %v378, 1
        %vm1852 = vcmp.ge.s32.totalorder %v379, 1
        %vm1853 = vcmp.ge.s32.totalorder %v380, 1
        %vm1854 = vcmp.ge.s32.totalorder %v381, 1
        %vm1855 = vcmp.ge.s32.totalorder %v382, 1
        %vm1856 = vcmp.ge.s32.totalorder %v383, 1
        %vm1857 = vcmp.ge.s32.totalorder %v384, 1
        %vm1858 = vcmp.ge.s32.totalorder %v385, 1
        %vm1859 = vcmp.ge.s32.totalorder %v386, 1
        %vm1860 = vcmp.ge.s32.totalorder %v387, 1
        %vm1861 = vcmp.ge.s32.totalorder %v388, 1
        %vm1862 = vcmp.ge.s32.totalorder %v389, 1
        %vm1863 = vcmp.ge.s32.totalorder %v390, 1
        %vm1864 = vcmp.le.s32.totalorder %v359, 4
        %vm1865 = vcmp.le.s32.totalorder %v360, 4
        %vm1866 = vcmp.le.s32.totalorder %v361, 4
        %vm1867 = vcmp.le.s32.totalorder %v362, 4
        %vm1868 = vcmp.le.s32.totalorder %v363, 4
        %vm1869 = vcmp.le.s32.totalorder %v364, 4
        %vm1870 = vcmp.le.s32.totalorder %v365, 4
        %vm1871 = vcmp.le.s32.totalorder %v366, 4
        %vm1872 = vcmp.le.s32.totalorder %v367, 4
        %vm1873 = vcmp.le.s32.totalorder %v368, 4
        %vm1874 = vcmp.le.s32.totalorder %v369, 4
        %vm1875 = vcmp.le.s32.totalorder %v370, 4
        %vm1876 = vcmp.le.s32.totalorder %v371, 4
        %vm1877 = vcmp.le.s32.totalorder %v372, 4
        %vm1878 = vcmp.le.s32.totalorder %v373, 4
        %vm1879 = vcmp.le.s32.totalorder %v374, 4
        %vm1880 = vcmp.le.s32.totalorder %v375, 4
        %vm1881 = vcmp.le.s32.totalorder %v376, 4
        %vm1882 = vcmp.le.s32.totalorder %v377, 4
        %vm1883 = vcmp.le.s32.totalorder %v378, 4
        %vm1884 = vcmp.le.s32.totalorder %v379, 4
        %vm1885 = vcmp.le.s32.totalorder %v380, 4
        %vm1886 = vcmp.le.s32.totalorder %v381, 4
        %vm1887 = vcmp.le.s32.totalorder %v382, 4
        %vm1888 = vcmp.le.s32.totalorder %v383, 4
        %vm1889 = vcmp.le.s32.totalorder %v384, 4
        %vm1890 = vcmp.le.s32.totalorder %v385, 4
        %vm1891 = vcmp.le.s32.totalorder %v386, 4
        %vm1892 = vcmp.le.s32.totalorder %v387, 4
        %vm1893 = vcmp.le.s32.totalorder %v388, 4
        %vm1894 = vcmp.le.s32.totalorder %v389, 4
        %vm1895 = vcmp.le.s32.totalorder %v390, 4
        %vm1896 = vmand %vm1832, %vm1864
        %vm1897 = vmand %vm1833, %vm1865
        %vm1898 = vmand %vm1834, %vm1866
        %vm1899 = vmand %vm1835, %vm1867
        %vm1900 = vmand %vm1836, %vm1868
        %vm1901 = vmand %vm1837, %vm1869
        %vm1902 = vmand %vm1838, %vm1870
        %vm1903 = vmand %vm1839, %vm1871
        %vm1904 = vmand %vm1840, %vm1872
        %vm1905 = vmand %vm1841, %vm1873
        %vm1906 = vmand %vm1842, %vm1874
        %vm1907 = vmand %vm1843, %vm1875
        %vm1908 = vmand %vm1844, %vm1876
        %vm1909 = vmand %vm1845, %vm1877
        %vm1910 = vmand %vm1846, %vm1878
        %vm1911 = vmand %vm1847, %vm1879
        %vm1912 = vmand %vm1848, %vm1880
        %vm1913 = vmand %vm1849, %vm1881
        %vm1914 = vmand %vm1850, %vm1882
        %vm1915 = vmand %vm1851, %vm1883
        %vm1916 = vmand %vm1852, %vm1884
        %vm1917 = vmand %vm1853, %vm1885
        %vm1918 = vmand %vm1854, %vm1886
        %vm1919 = vmand %vm1855, %vm1887
        %vm1920 = vmand %vm1856, %vm1888
        %vm1921 = vmand %vm1857, %vm1889
        %vm1922 = vmand %vm1858, %vm1890
        %vm1923 = vmand %vm1859, %vm1891
        %vm1924 = vmand %vm1860, %vm1892
        %vm1925 = vmand %vm1861, %vm1893
        %vm1926 = vmand %vm1862, %vm1894
        %vm1927 = vmand %vm1863, %vm1895
        %v1928 = vsel %vm1896, %v1800, -9e+15
        %v1929 = vsel %vm1897, %v1801, -9e+15
        %v1930 = vsel %vm1898, %v1802, -9e+15
        %v1931 = vsel %vm1899, %v1803, -9e+15
        %v1932 = vsel %vm1900, %v1804, -9e+15
        %v1933 = vsel %vm1901, %v1805, -9e+15
        %v1934 = vsel %vm1902, %v1806, -9e+15
        %v1935 = vsel %vm1903, %v1807, -9e+15
        %v1936 = vsel %vm1904, %v1808, -9e+15
        %v1937 = vsel %vm1905, %v1809, -9e+15
        %v1938 = vsel %vm1906, %v1810, -9e+15
        %v1939 = vsel %vm1907, %v1811, -9e+15
        %v1940 = vsel %vm1908, %v1812, -9e+15
        %v1941 = vsel %vm1909, %v1813, -9e+15
        %v1942 = vsel %vm1910, %v1814, -9e+15
        %v1943 = vsel %vm1911, %v1815, -9e+15
        %v1944 = vsel %vm1912, %v1816, -9e+15
        %v1945 = vsel %vm1913, %v1817, -9e+15
        %v1946 = vsel %vm1914, %v1818, -9e+15
        %v1947 = vsel %vm1915, %v1819, -9e+15
        %v1948 = vsel %vm1916, %v1820, -9e+15
        %v1949 = vsel %vm1917, %v1821, -9e+15
        %v1950 = vsel %vm1918, %v1822, -9e+15
        %v1951 = vsel %vm1919, %v1823, -9e+15
        %v1952 = vsel %vm1920, %v1824, -9e+15
        %v1953 = vsel %vm1921, %v1825, -9e+15
        %v1954 = vsel %vm1922, %v1826, -9e+15
        %v1955 = vsel %vm1923, %v1827, -9e+15
        %v1956 = vsel %vm1924, %v1828, -9e+15
        %v1957 = vsel %vm1925, %v1829, -9e+15
        %v1958 = vsel %vm1926, %v1830, -9e+15
        %v1959 = vsel %vm1927, %v1831, -9e+15
        %vm1960 = vcmp.eq.s32.totalorder %v391, 1
        %vm1961 = vcmp.eq.s32.totalorder %v392, 1
        %v1962 = vsel %vm1960, 1, 0
        %v1963 = vsel %vm1961, 1, 0
        %v1964 = vperm.slane %v1962, 0
        %v1965 = vperm.slane %v1963, 0
        %vm1966 = vcmp.eq.s32.totalorder %v1964, 1
        %vm1967 = vcmp.eq.s32.totalorder %v1965, 1
        %v1968 = vsel %vm1966, %v1928, -inf
        %v1969 = vsel %vm1966, %v1929, -inf
        %v1970 = vsel %vm1966, %v1930, -inf
        %v1971 = vsel %vm1966, %v1931, -inf
        %v1972 = vsel %vm1966, %v1932, -inf
        %v1973 = vsel %vm1966, %v1933, -inf
        %v1974 = vsel %vm1966, %v1934, -inf
        %v1975 = vsel %vm1966, %v1935, -inf
        %v1976 = vsel %vm1966, %v1936, -inf
        %v1977 = vsel %vm1966, %v1937, -inf
        %v1978 = vsel %vm1966, %v1938, -inf
        %v1979 = vsel %vm1966, %v1939, -inf
        %v1980 = vsel %vm1966, %v1940, -inf
        %v1981 = vsel %vm1966, %v1941, -inf
        %v1982 = vsel %vm1966, %v1942, -inf
        %v1983 = vsel %vm1966, %v1943, -inf
        %v1984 = vsel %vm1967, %v1944, -inf
        %v1985 = vsel %vm1967, %v1945, -inf
        %v1986 = vsel %vm1967, %v1946, -inf
        %v1987 = vsel %vm1967, %v1947, -inf
        %v1988 = vsel %vm1967, %v1948, -inf
        %v1989 = vsel %vm1967, %v1949, -inf
        %v1990 = vsel %vm1967, %v1950, -inf
        %v1991 = vsel %vm1967, %v1951, -inf
        %v1992 = vsel %vm1967, %v1952, -inf
        %v1993 = vsel %vm1967, %v1953, -inf
        %v1994 = vsel %vm1967, %v1954, -inf
        %v1995 = vsel %vm1967, %v1955, -inf
        %v1996 = vsel %vm1967, %v1956, -inf
        %v1997 = vsel %vm1967, %v1957, -inf
        %v1998 = vsel %vm1967, %v1958, -inf
        %v1999 = vsel %vm1967, %v1959, -inf
        %2000 = vmax.xlane.f32.xlu0 %v1968
        %v2001 = vpop.xlane.xlu0 %2000
        %2002 = vmax.xlane.f32.xlu0 %v1969
        %v2003 = vpop.xlane.xlu0 %2002
        %2004 = vmax.xlane.f32.xlu0 %v1970
        %v2005 = vpop.xlane.xlu0 %2004
        %2006 = vmax.xlane.f32.xlu0 %v1971
        %v2007 = vpop.xlane.xlu0 %2006
        %2008 = vmax.xlane.f32.xlu0 %v1972
        %v2009 = vpop.xlane.xlu0 %2008
        %2010 = vmax.xlane.f32.xlu0 %v1973
        %v2011 = vpop.xlane.xlu0 %2010
        %2012 = vmax.xlane.f32.xlu0 %v1974
        %v2013 = vpop.xlane.xlu0 %2012
        %2014 = vmax.xlane.f32.xlu0 %v1975
        %v2015 = vpop.xlane.xlu0 %2014
        %2016 = vmax.xlane.f32.xlu0 %v1976
        %v2017 = vpop.xlane.xlu0 %2016
        %2018 = vmax.xlane.f32.xlu0 %v1977
        %v2019 = vpop.xlane.xlu0 %2018
        %2020 = vmax.xlane.f32.xlu0 %v1978
        %v2021 = vpop.xlane.xlu0 %2020
        %2022 = vmax.xlane.f32.xlu0 %v1979
        %v2023 = vpop.xlane.xlu0 %2022
        %2024 = vmax.xlane.f32.xlu0 %v1980
        %v2025 = vpop.xlane.xlu0 %2024
        %2026 = vmax.xlane.f32.xlu0 %v1981
        %v2027 = vpop.xlane.xlu0 %2026
        %2028 = vmax.xlane.f32.xlu0 %v1982
        %v2029 = vpop.xlane.xlu0 %2028
        %2030 = vmax.xlane.f32.xlu0 %v1983
        %v2031 = vpop.xlane.xlu0 %2030
        %2032 = vmax.xlane.f32.xlu0 %v1984
        %v2033 = vpop.xlane.xlu0 %2032
        %2034 = vmax.xlane.f32.xlu0 %v1985
        %v2035 = vpop.xlane.xlu0 %2034
        %2036 = vmax.xlane.f32.xlu0 %v1986
        %v2037 = vpop.xlane.xlu0 %2036
        %2038 = vmax.xlane.f32.xlu0 %v1987
        %v2039 = vpop.xlane.xlu0 %2038
        %2040 = vmax.xlane.f32.xlu0 %v1988
        %v2041 = vpop.xlane.xlu0 %2040
        %2042 = vmax.xlane.f32.xlu0 %v1989
        %v2043 = vpop.xlane.xlu0 %2042
        %2044 = vmax.xlane.f32.xlu0 %v1990
        %v2045 = vpop.xlane.xlu0 %2044
        %2046 = vmax.xlane.f32.xlu0 %v1991
        %v2047 = vpop.xlane.xlu0 %2046
        %2048 = vmax.xlane.f32.xlu0 %v1992
        %v2049 = vpop.xlane.xlu0 %2048
        %2050 = vmax.xlane.f32.xlu0 %v1993
        %v2051 = vpop.xlane.xlu0 %2050
        %2052 = vmax.xlane.f32.xlu0 %v1994
        %v2053 = vpop.xlane.xlu0 %2052
        %2054 = vmax.xlane.f32.xlu0 %v1995
        %v2055 = vpop.xlane.xlu0 %2054
        %2056 = vmax.xlane.f32.xlu0 %v1996
        %v2057 = vpop.xlane.xlu0 %2056
        %2058 = vmax.xlane.f32.xlu0 %v1997
        %v2059 = vpop.xlane.xlu0 %2058
        %2060 = vmax.xlane.f32.xlu0 %v1998
        %v2061 = vpop.xlane.xlu0 %2060
        %2062 = vmax.xlane.f32.xlu0 %v1999
        %v2063 = vpop.xlane.xlu0 %2062
        %v2064 = vsub.f32 %v1968, %v2001
        %v2065 = vsub.f32 %v1969, %v2003
        %v2066 = vsub.f32 %v1970, %v2005
        %v2067 = vsub.f32 %v1971, %v2007
        %v2068 = vsub.f32 %v1972, %v2009
        %v2069 = vsub.f32 %v1973, %v2011
        %v2070 = vsub.f32 %v1974, %v2013
        %v2071 = vsub.f32 %v1975, %v2015
        %v2072 = vsub.f32 %v1976, %v2017
        %v2073 = vsub.f32 %v1977, %v2019
        %v2074 = vsub.f32 %v1978, %v2021
        %v2075 = vsub.f32 %v1979, %v2023
        %v2076 = vsub.f32 %v1980, %v2025
        %v2077 = vsub.f32 %v1981, %v2027
        %v2078 = vsub.f32 %v1982, %v2029
        %v2079 = vsub.f32 %v1983, %v2031
        %v2080 = vsub.f32 %v1984, %v2033
        %v2081 = vsub.f32 %v1985, %v2035
        %v2082 = vsub.f32 %v1986, %v2037
        %v2083 = vsub.f32 %v1987, %v2039
        %v2084 = vsub.f32 %v1988, %v2041
        %v2085 = vsub.f32 %v1989, %v2043
        %v2086 = vsub.f32 %v1990, %v2045
        %v2087 = vsub.f32 %v1991, %v2047
        %v2088 = vsub.f32 %v1992, %v2049
        %v2089 = vsub.f32 %v1993, %v2051
        %v2090 = vsub.f32 %v1994, %v2053
        %v2091 = vsub.f32 %v1995, %v2055
        %v2092 = vsub.f32 %v1996, %v2057
        %v2093 = vsub.f32 %v1997, %v2059
        %v2094 = vsub.f32 %v1998, %v2061
        %v2095 = vsub.f32 %v1999, %v2063
        %v2096 = vmul.f32 %v2064, 1.442695
        %v2097 = vpow.pop %v2096
        %v2098 = vmul.f32 %v2065, 1.442695
        %v2099 = vpow.pop %v2098
        %v2100 = vmul.f32 %v2066, 1.442695
        %v2101 = vpow.pop %v2100
        %v2102 = vmul.f32 %v2067, 1.442695
        %v2103 = vpow.pop %v2102
        %v2104 = vmul.f32 %v2068, 1.442695
        %v2105 = vpow.pop %v2104
        %v2106 = vmul.f32 %v2069, 1.442695
        %v2107 = vpow.pop %v2106
        %v2108 = vmul.f32 %v2070, 1.442695
        %v2109 = vpow.pop %v2108
        %v2110 = vmul.f32 %v2071, 1.442695
        %v2111 = vpow.pop %v2110
        %v2112 = vmul.f32 %v2072, 1.442695
        %v2113 = vpow.pop %v2112
        %v2114 = vmul.f32 %v2073, 1.442695
        %v2115 = vpow.pop %v2114
        %v2116 = vmul.f32 %v2074, 1.442695
        %v2117 = vpow.pop %v2116
        %v2118 = vmul.f32 %v2075, 1.442695
        %v2119 = vpow.pop %v2118
        %v2120 = vmul.f32 %v2076, 1.442695
        %v2121 = vpow.pop %v2120
        %v2122 = vmul.f32 %v2077, 1.442695
        %v2123 = vpow.pop %v2122
        %v2124 = vmul.f32 %v2078, 1.442695
        %v2125 = vpow.pop %v2124
        %v2126 = vmul.f32 %v2079, 1.442695
        %v2127 = vpow.pop %v2126
        %v2128 = vmul.f32 %v2080, 1.442695
        %v2129 = vpow.pop %v2128
        %v2130 = vmul.f32 %v2081, 1.442695
        %v2131 = vpow.pop %v2130
        %v2132 = vmul.f32 %v2082, 1.442695
        %v2133 = vpow.pop %v2132
        %v2134 = vmul.f32 %v2083, 1.442695
        %v2135 = vpow.pop %v2134
        %v2136 = vmul.f32 %v2084, 1.442695
        %v2137 = vpow.pop %v2136
        %v2138 = vmul.f32 %v2085, 1.442695
        %v2139 = vpow.pop %v2138
        %v2140 = vmul.f32 %v2086, 1.442695
        %v2141 = vpow.pop %v2140
        %v2142 = vmul.f32 %v2087, 1.442695
        %v2143 = vpow.pop %v2142
        %v2144 = vmul.f32 %v2088, 1.442695
        %v2145 = vpow.pop %v2144
        %v2146 = vmul.f32 %v2089, 1.442695
        %v2147 = vpow.pop %v2146
        %v2148 = vmul.f32 %v2090, 1.442695
        %v2149 = vpow.pop %v2148
        %v2150 = vmul.f32 %v2091, 1.442695
        %v2151 = vpow.pop %v2150
        %v2152 = vmul.f32 %v2092, 1.442695
        %v2153 = vpow.pop %v2152
        %v2154 = vmul.f32 %v2093, 1.442695
        %v2155 = vpow.pop %v2154
        %v2156 = vmul.f32 %v2094, 1.442695
        %v2157 = vpow.pop %v2156
        %v2158 = vmul.f32 %v2095, 1.442695
        %v2159 = vpow.pop %v2158
        %v2160 = vpack.c.bf16 %v2097, %v2097
        %v2161 = vpack.c.bf16 %v2099, %v2099
        %v2162 = vpack.c.bf16 %v2101, %v2101
        %v2163 = vpack.c.bf16 %v2103, %v2103
        %v2164 = vpack.c.bf16 %v2105, %v2105
        %v2165 = vpack.c.bf16 %v2107, %v2107
        %v2166 = vpack.c.bf16 %v2109, %v2109
        %v2167 = vpack.c.bf16 %v2111, %v2111
        %v2168 = vpack.c.bf16 %v2113, %v2113
        %v2169 = vpack.c.bf16 %v2115, %v2115
        %v2170 = vpack.c.bf16 %v2117, %v2117
        %v2171 = vpack.c.bf16 %v2119, %v2119
        %v2172 = vpack.c.bf16 %v2121, %v2121
        %v2173 = vpack.c.bf16 %v2123, %v2123
        %v2174 = vpack.c.bf16 %v2125, %v2125
        %v2175 = vpack.c.bf16 %v2127, %v2127
        %v2176 = vpack.c.bf16 %v2129, %v2129
        %v2177 = vpack.c.bf16 %v2131, %v2131
        %v2178 = vpack.c.bf16 %v2133, %v2133
        %v2179 = vpack.c.bf16 %v2135, %v2135
        %v2180 = vpack.c.bf16 %v2137, %v2137
        %v2181 = vpack.c.bf16 %v2139, %v2139
        %v2182 = vpack.c.bf16 %v2141, %v2141
        %v2183 = vpack.c.bf16 %v2143, %v2143
        %v2184 = vpack.c.bf16 %v2145, %v2145
        %v2185 = vpack.c.bf16 %v2147, %v2147
        %v2186 = vpack.c.bf16 %v2149, %v2149
        %v2187 = vpack.c.bf16 %v2151, %v2151
        %v2188 = vpack.c.bf16 %v2153, %v2153
        %v2189 = vpack.c.bf16 %v2155, %v2155
        %v2190 = vpack.c.bf16 %v2157, %v2157
        %v2191 = vpack.c.bf16 %v2159, %v2159
        %v2208 = vunpack.c.l.b16 %v2160
        %v2209 = vunpack.c.l.b16 %v2161
        %v2210 = vunpack.c.l.b16 %v2162
        %v2211 = vunpack.c.l.b16 %v2163
        %v2212 = vunpack.c.l.b16 %v2164
        %v2213 = vunpack.c.l.b16 %v2165
        %v2214 = vunpack.c.l.b16 %v2166
        %v2215 = vunpack.c.l.b16 %v2167
        %v2216 = vunpack.c.l.b16 %v2168
        %v2217 = vunpack.c.l.b16 %v2169
        %v2218 = vunpack.c.l.b16 %v2170
        %v2219 = vunpack.c.l.b16 %v2171
        %v2220 = vunpack.c.l.b16 %v2172
        %v2221 = vunpack.c.l.b16 %v2173
        %v2222 = vunpack.c.l.b16 %v2174
        %v2223 = vunpack.c.l.b16 %v2175
        %v2224 = vpack.c.b16 %v2209, %v2208
        %v2225 = vpack.c.b16 %v2211, %v2210
        %v2226 = vpack.c.b16 %v2213, %v2212
        %v2227 = vpack.c.b16 %v2215, %v2214
        %v2228 = vpack.c.b16 %v2217, %v2216
        %v2229 = vpack.c.b16 %v2219, %v2218
        %v2230 = vpack.c.b16 %v2221, %v2220
        %v2231 = vpack.c.b16 %v2223, %v2222
        %2240 = vmatpush.bf16.msra.mxu0 %v957
        %2241 = vmatpush.bf16.msra.mxu0 %v956
        %2242 = vmatpush.bf16.msra.mxu0 %v955
        %2243 = vmatpush.bf16.msra.mxu0 %v954
        %2244 = vmatpush.bf16.msra.mxu0 %v953
        %2245 = vmatpush.bf16.msra.mxu0 %v952
        %2246 = vmatpush.bf16.msra.mxu0 %v951
        %2247 = vmatpush.bf16.msra.mxu0 %v950
        %2248 = vmatmul.bf16.gmra.mxu0 %v2224
        %v2249 = vpop.f32.mrf.mxu0
        %v2250 = vadd.f32 0.0, %v2249
        %v2251 = vpop.f32.mrf.mxu0
        %v2252 = vadd.f32 0.0, %v2251
        %2253 = vmatmul.bf16.gmra.mxu0 %v2225
        %v2254 = vpop.f32.mrf.mxu0
        %v2255 = vadd.f32 0.0, %v2254
        %v2256 = vpop.f32.mrf.mxu0
        %v2257 = vadd.f32 0.0, %v2256
        %2258 = vmatmul.bf16.gmra.mxu0 %v2226
        %v2259 = vpop.f32.mrf.mxu0
        %v2260 = vadd.f32 0.0, %v2259
        %v2261 = vpop.f32.mrf.mxu0
        %v2262 = vadd.f32 0.0, %v2261
        %2263 = vmatmul.bf16.gmra.mxu0 %v2227
        %v2264 = vpop.f32.mrf.mxu0
        %v2265 = vadd.f32 0.0, %v2264
        %v2266 = vpop.f32.mrf.mxu0
        %v2267 = vadd.f32 0.0, %v2266
        %2268 = vmatmul.bf16.gmra.mxu0 %v2228
        %v2269 = vpop.f32.mrf.mxu0
        %v2270 = vadd.f32 0.0, %v2269
        %v2271 = vpop.f32.mrf.mxu0
        %v2272 = vadd.f32 0.0, %v2271
        %2273 = vmatmul.bf16.gmra.mxu0 %v2229
        %v2274 = vpop.f32.mrf.mxu0
        %v2275 = vadd.f32 0.0, %v2274
        %v2276 = vpop.f32.mrf.mxu0
        %v2277 = vadd.f32 0.0, %v2276
        %2278 = vmatmul.bf16.gmra.mxu0 %v2230
        %v2279 = vpop.f32.mrf.mxu0
        %v2280 = vadd.f32 0.0, %v2279
        %v2281 = vpop.f32.mrf.mxu0
        %v2282 = vadd.f32 0.0, %v2281
        %2283 = vmatmul.bf16.gmra.mxu0 %v2231
        %v2284 = vpop.f32.mrf.mxu0
        %v2285 = vadd.f32 0.0, %v2284
        %v2286 = vpop.f32.mrf.mxu0
        %v2287 = vadd.f32 0.0, %v2286
        %2288 = vdwg.mxu0
        %v2305 = vunpack.c.l.b16 %v2176
        %v2306 = vunpack.c.l.b16 %v2177
        %v2307 = vunpack.c.l.b16 %v2178
        %v2308 = vunpack.c.l.b16 %v2179
        %v2309 = vunpack.c.l.b16 %v2180
        %v2310 = vunpack.c.l.b16 %v2181
        %v2311 = vunpack.c.l.b16 %v2182
        %v2312 = vunpack.c.l.b16 %v2183
        %v2313 = vunpack.c.l.b16 %v2184
        %v2314 = vunpack.c.l.b16 %v2185
        %v2315 = vunpack.c.l.b16 %v2186
        %v2316 = vunpack.c.l.b16 %v2187
        %v2317 = vunpack.c.l.b16 %v2188
        %v2318 = vunpack.c.l.b16 %v2189
        %v2319 = vunpack.c.l.b16 %v2190
        %v2320 = vunpack.c.l.b16 %v2191
        %v2321 = vpack.c.b16 %v2306, %v2305
        %v2322 = vpack.c.b16 %v2308, %v2307
        %v2323 = vpack.c.b16 %v2310, %v2309
        %v2324 = vpack.c.b16 %v2312, %v2311
        %v2325 = vpack.c.b16 %v2314, %v2313
        %v2326 = vpack.c.b16 %v2316, %v2315
        %v2327 = vpack.c.b16 %v2318, %v2317
        %v2328 = vpack.c.b16 %v2320, %v2319
        %2337 = vmatpush.bf16.msra.mxu0 %v1366
        %2338 = vmatpush.bf16.msra.mxu0 %v1365
        %2339 = vmatpush.bf16.msra.mxu0 %v1364
        %2340 = vmatpush.bf16.msra.mxu0 %v1363
        %2341 = vmatpush.bf16.msra.mxu0 %v1362
        %2342 = vmatpush.bf16.msra.mxu0 %v1361
        %2343 = vmatpush.bf16.msra.mxu0 %v1360
        %2344 = vmatpush.bf16.msra.mxu0 %v1359
        %2345 = vmatmul.bf16.gmra.mxu0 %v2321
        %v2346 = vpop.f32.mrf.mxu0
        %v2347 = vadd.f32 0.0, %v2346
        %v2348 = vpop.f32.mrf.mxu0
        %v2349 = vadd.f32 0.0, %v2348
        %2350 = vmatmul.bf16.gmra.mxu0 %v2322
        %v2351 = vpop.f32.mrf.mxu0
        %v2352 = vadd.f32 0.0, %v2351
        %v2353 = vpop.f32.mrf.mxu0
        %v2354 = vadd.f32 0.0, %v2353
        %2355 = vmatmul.bf16.gmra.mxu0 %v2323
        %v2356 = vpop.f32.mrf.mxu0
        %v2357 = vadd.f32 0.0, %v2356
        %v2358 = vpop.f32.mrf.mxu0
        %v2359 = vadd.f32 0.0, %v2358
        %2360 = vmatmul.bf16.gmra.mxu0 %v2324
        %v2361 = vpop.f32.mrf.mxu0
        %v2362 = vadd.f32 0.0, %v2361
        %v2363 = vpop.f32.mrf.mxu0
        %v2364 = vadd.f32 0.0, %v2363
        %2365 = vmatmul.bf16.gmra.mxu0 %v2325
        %v2366 = vpop.f32.mrf.mxu0
        %v2367 = vadd.f32 0.0, %v2366
        %v2368 = vpop.f32.mrf.mxu0
        %v2369 = vadd.f32 0.0, %v2368
        %2370 = vmatmul.bf16.gmra.mxu0 %v2326
        %v2371 = vpop.f32.mrf.mxu0
        %v2372 = vadd.f32 0.0, %v2371
        %v2373 = vpop.f32.mrf.mxu0
        %v2374 = vadd.f32 0.0, %v2373
        %2375 = vmatmul.bf16.gmra.mxu0 %v2327
        %v2376 = vpop.f32.mrf.mxu0
        %v2377 = vadd.f32 0.0, %v2376
        %v2378 = vpop.f32.mrf.mxu0
        %v2379 = vadd.f32 0.0, %v2378
        %2380 = vmatmul.bf16.gmra.mxu0 %v2328
        %v2381 = vpop.f32.mrf.mxu0
        %v2382 = vadd.f32 0.0, %v2381
        %v2383 = vpop.f32.mrf.mxu0
        %v2384 = vadd.f32 0.0, %v2383
        %2385 = vdwg.mxu0
        %v2386 = vrcp.pop %v2250
        %v2387 = vmul.f32 %v2250, %v2386
        %v2388 = vsub.f32 1.0, %v2387
        %v2389 = vmul.f32 %v2386, %v2388
        %v2390 = vadd.f32 %v2386, %v2389
        %vm2391 = vweird.f32 %v2250
        %vm2392 = vweird.f32 %v2386
        %vm2393 = vmor %vm2391, %vm2392
        %v2394 = vsel %vm2393, %v2386, %v2390
        %v2395 = vand.u32 2147483647, %v2250
        %vm2396 = vcmp.eq.f32.partialorder %v2395, 8.507059e+37
        %v2397 = vand.u32 %v2250, 2147483648
        %v2398 = vor.u32 1.1754944e-38, %v2397
        %v2399 = vsel %vm2396, %v2398, %v2394
        %v2400 = vrcp.pop %v2252
        %v2401 = vmul.f32 %v2252, %v2400
        %v2402 = vsub.f32 1.0, %v2401
        %v2403 = vmul.f32 %v2400, %v2402
        %v2404 = vadd.f32 %v2400, %v2403
        %vm2405 = vweird.f32 %v2252
        %vm2406 = vweird.f32 %v2400
        %vm2407 = vmor %vm2405, %vm2406
        %v2408 = vsel %vm2407, %v2400, %v2404
        %v2409 = vand.u32 2147483647, %v2252
        %vm2410 = vcmp.eq.f32.partialorder %v2409, 8.507059e+37
        %v2411 = vand.u32 %v2252, 2147483648
        %v2412 = vor.u32 1.1754944e-38, %v2411
        %v2413 = vsel %vm2410, %v2412, %v2408
        %v2414 = vrcp.pop %v2255
        %v2415 = vmul.f32 %v2255, %v2414
        %v2416 = vsub.f32 1.0, %v2415
        %v2417 = vmul.f32 %v2414, %v2416
        %v2418 = vadd.f32 %v2414, %v2417
        %vm2419 = vweird.f32 %v2255
        %vm2420 = vweird.f32 %v2414
        %vm2421 = vmor %vm2419, %vm2420
        %v2422 = vsel %vm2421, %v2414, %v2418
        %v2423 = vand.u32 2147483647, %v2255
        %vm2424 = vcmp.eq.f32.partialorder %v2423, 8.507059e+37
        %v2425 = vand.u32 %v2255, 2147483648
        %v2426 = vor.u32 1.1754944e-38, %v2425
        %v2427 = vsel %vm2424, %v2426, %v2422
        %v2428 = vrcp.pop %v2257
        %v2429 = vmul.f32 %v2257, %v2428
        %v2430 = vsub.f32 1.0, %v2429
        %v2431 = vmul.f32 %v2428, %v2430
        %v2432 = vadd.f32 %v2428, %v2431
        %vm2433 = vweird.f32 %v2257
        %vm2434 = vweird.f32 %v2428
        %vm2435 = vmor %vm2433, %vm2434
        %v2436 = vsel %vm2435, %v2428, %v2432
        %v2437 = vand.u32 2147483647, %v2257
        %vm2438 = vcmp.eq.f32.partialorder %v2437, 8.507059e+37
        %v2439 = vand.u32 %v2257, 2147483648
        %v2440 = vor.u32 1.1754944e-38, %v2439
        %v2441 = vsel %vm2438, %v2440, %v2436
        %v2442 = vrcp.pop %v2260
        %v2443 = vmul.f32 %v2260, %v2442
        %v2444 = vsub.f32 1.0, %v2443
        %v2445 = vmul.f32 %v2442, %v2444
        %v2446 = vadd.f32 %v2442, %v2445
        %vm2447 = vweird.f32 %v2260
        %vm2448 = vweird.f32 %v2442
        %vm2449 = vmor %vm2447, %vm2448
        %v2450 = vsel %vm2449, %v2442, %v2446
        %v2451 = vand.u32 2147483647, %v2260
        %vm2452 = vcmp.eq.f32.partialorder %v2451, 8.507059e+37
        %v2453 = vand.u32 %v2260, 2147483648
        %v2454 = vor.u32 1.1754944e-38, %v2453
        %v2455 = vsel %vm2452, %v2454, %v2450
        %v2456 = vrcp.pop %v2262
        %v2457 = vmul.f32 %v2262, %v2456
        %v2458 = vsub.f32 1.0, %v2457
        %v2459 = vmul.f32 %v2456, %v2458
        %v2460 = vadd.f32 %v2456, %v2459
        %vm2461 = vweird.f32 %v2262
        %vm2462 = vweird.f32 %v2456
        %vm2463 = vmor %vm2461, %vm2462
        %v2464 = vsel %vm2463, %v2456, %v2460
        %v2465 = vand.u32 2147483647, %v2262
        %vm2466 = vcmp.eq.f32.partialorder %v2465, 8.507059e+37
        %v2467 = vand.u32 %v2262, 2147483648
        %v2468 = vor.u32 1.1754944e-38, %v2467
        %v2469 = vsel %vm2466, %v2468, %v2464
        %v2470 = vrcp.pop %v2265
        %v2471 = vmul.f32 %v2265, %v2470
        %v2472 = vsub.f32 1.0, %v2471
        %v2473 = vmul.f32 %v2470, %v2472
        %v2474 = vadd.f32 %v2470, %v2473
        %vm2475 = vweird.f32 %v2265
        %vm2476 = vweird.f32 %v2470
        %vm2477 = vmor %vm2475, %vm2476
        %v2478 = vsel %vm2477, %v2470, %v2474
        %v2479 = vand.u32 2147483647, %v2265
        %vm2480 = vcmp.eq.f32.partialorder %v2479, 8.507059e+37
        %v2481 = vand.u32 %v2265, 2147483648
        %v2482 = vor.u32 1.1754944e-38, %v2481
        %v2483 = vsel %vm2480, %v2482, %v2478
        %v2484 = vrcp.pop %v2267
        %v2485 = vmul.f32 %v2267, %v2484
        %v2486 = vsub.f32 1.0, %v2485
        %v2487 = vmul.f32 %v2484, %v2486
        %v2488 = vadd.f32 %v2484, %v2487
        %vm2489 = vweird.f32 %v2267
        %vm2490 = vweird.f32 %v2484
        %vm2491 = vmor %vm2489, %vm2490
        %v2492 = vsel %vm2491, %v2484, %v2488
        %v2493 = vand.u32 2147483647, %v2267
        %vm2494 = vcmp.eq.f32.partialorder %v2493, 8.507059e+37
        %v2495 = vand.u32 %v2267, 2147483648
        %v2496 = vor.u32 1.1754944e-38, %v2495
        %v2497 = vsel %vm2494, %v2496, %v2492
        %v2498 = vrcp.pop %v2270
        %v2499 = vmul.f32 %v2270, %v2498
        %v2500 = vsub.f32 1.0, %v2499
        %v2501 = vmul.f32 %v2498, %v2500
        %v2502 = vadd.f32 %v2498, %v2501
        %vm2503 = vweird.f32 %v2270
        %vm2504 = vweird.f32 %v2498
        %vm2505 = vmor %vm2503, %vm2504
        %v2506 = vsel %vm2505, %v2498, %v2502
        %v2507 = vand.u32 2147483647, %v2270
        %vm2508 = vcmp.eq.f32.partialorder %v2507, 8.507059e+37
        %v2509 = vand.u32 %v2270, 2147483648
        %v2510 = vor.u32 1.1754944e-38, %v2509
        %v2511 = vsel %vm2508, %v2510, %v2506
        %v2512 = vrcp.pop %v2272
        %v2513 = vmul.f32 %v2272, %v2512
        %v2514 = vsub.f32 1.0, %v2513
        %v2515 = vmul.f32 %v2512, %v2514
        %v2516 = vadd.f32 %v2512, %v2515
        %vm2517 = vweird.f32 %v2272
        %vm2518 = vweird.f32 %v2512
        %vm2519 = vmor %vm2517, %vm2518
        %v2520 = vsel %vm2519, %v2512, %v2516
        %v2521 = vand.u32 2147483647, %v2272
        %vm2522 = vcmp.eq.f32.partialorder %v2521, 8.507059e+37
        %v2523 = vand.u32 %v2272, 2147483648
        %v2524 = vor.u32 1.1754944e-38, %v2523
        %v2525 = vsel %vm2522, %v2524, %v2520
        %v2526 = vrcp.pop %v2275
        %v2527 = vmul.f32 %v2275, %v2526
        %v2528 = vsub.f32 1.0, %v2527
        %v2529 = vmul.f32 %v2526, %v2528
        %v2530 = vadd.f32 %v2526, %v2529
        %vm2531 = vweird.f32 %v2275
        %vm2532 = vweird.f32 %v2526
        %vm2533 = vmor %vm2531, %vm2532
        %v2534 = vsel %vm2533, %v2526, %v2530
        %v2535 = vand.u32 2147483647, %v2275
        %vm2536 = vcmp.eq.f32.partialorder %v2535, 8.507059e+37
        %v2537 = vand.u32 %v2275, 2147483648
        %v2538 = vor.u32 1.1754944e-38, %v2537
        %v2539 = vsel %vm2536, %v2538, %v2534
        %v2540 = vrcp.pop %v2277
        %v2541 = vmul.f32 %v2277, %v2540
        %v2542 = vsub.f32 1.0, %v2541
        %v2543 = vmul.f32 %v2540, %v2542
        %v2544 = vadd.f32 %v2540, %v2543
        %vm2545 = vweird.f32 %v2277
        %vm2546 = vweird.f32 %v2540
        %vm2547 = vmor %vm2545, %vm2546
        %v2548 = vsel %vm2547, %v2540, %v2544
        %v2549 = vand.u32 2147483647, %v2277
        %vm2550 = vcmp.eq.f32.partialorder %v2549, 8.507059e+37
        %v2551 = vand.u32 %v2277, 2147483648
        %v2552 = vor.u32 1.1754944e-38, %v2551
        %v2553 = vsel %vm2550, %v2552, %v2548
        %v2554 = vrcp.pop %v2280
        %v2555 = vmul.f32 %v2280, %v2554
        %v2556 = vsub.f32 1.0, %v2555
        %v2557 = vmul.f32 %v2554, %v2556
        %v2558 = vadd.f32 %v2554, %v2557
        %vm2559 = vweird.f32 %v2280
        %vm2560 = vweird.f32 %v2554
        %vm2561 = vmor %vm2559, %vm2560
        %v2562 = vsel %vm2561, %v2554, %v2558
        %v2563 = vand.u32 2147483647, %v2280
        %vm2564 = vcmp.eq.f32.partialorder %v2563, 8.507059e+37
        %v2565 = vand.u32 %v2280, 2147483648
        %v2566 = vor.u32 1.1754944e-38, %v2565
        %v2567 = vsel %vm2564, %v2566, %v2562
        %v2568 = vrcp.pop %v2282
        %v2569 = vmul.f32 %v2282, %v2568
        %v2570 = vsub.f32 1.0, %v2569
        %v2571 = vmul.f32 %v2568, %v2570
        %v2572 = vadd.f32 %v2568, %v2571
        %vm2573 = vweird.f32 %v2282
        %vm2574 = vweird.f32 %v2568
        %vm2575 = vmor %vm2573, %vm2574
        %v2576 = vsel %vm2575, %v2568, %v2572
        %v2577 = vand.u32 2147483647, %v2282
        %vm2578 = vcmp.eq.f32.partialorder %v2577, 8.507059e+37
        %v2579 = vand.u32 %v2282, 2147483648
        %v2580 = vor.u32 1.1754944e-38, %v2579
        %v2581 = vsel %vm2578, %v2580, %v2576
        %v2582 = vrcp.pop %v2285
        %v2583 = vmul.f32 %v2285, %v2582
        %v2584 = vsub.f32 1.0, %v2583
        %v2585 = vmul.f32 %v2582, %v2584
        %v2586 = vadd.f32 %v2582, %v2585
        %vm2587 = vweird.f32 %v2285
        %vm2588 = vweird.f32 %v2582
        %vm2589 = vmor %vm2587, %vm2588
        %v2590 = vsel %vm2589, %v2582, %v2586
        %v2591 = vand.u32 2147483647, %v2285
        %vm2592 = vcmp.eq.f32.partialorder %v2591, 8.507059e+37
        %v2593 = vand.u32 %v2285, 2147483648
        %v2594 = vor.u32 1.1754944e-38, %v2593
        %v2595 = vsel %vm2592, %v2594, %v2590
        %v2596 = vrcp.pop %v2287
        %v2597 = vmul.f32 %v2287, %v2596
        %v2598 = vsub.f32 1.0, %v2597
        %v2599 = vmul.f32 %v2596, %v2598
        %v2600 = vadd.f32 %v2596, %v2599
        %vm2601 = vweird.f32 %v2287
        %vm2602 = vweird.f32 %v2596
        %vm2603 = vmor %vm2601, %vm2602
        %v2604 = vsel %vm2603, %v2596, %v2600
        %v2605 = vand.u32 2147483647, %v2287
        %vm2606 = vcmp.eq.f32.partialorder %v2605, 8.507059e+37
        %v2607 = vand.u32 %v2287, 2147483648
        %v2608 = vor.u32 1.1754944e-38, %v2607
        %v2609 = vsel %vm2606, %v2608, %v2604
        %v2610 = vrcp.pop %v2347
        %v2611 = vmul.f32 %v2347, %v2610
        %v2612 = vsub.f32 1.0, %v2611
        %v2613 = vmul.f32 %v2610, %v2612
        %v2614 = vadd.f32 %v2610, %v2613
        %vm2615 = vweird.f32 %v2347
        %vm2616 = vweird.f32 %v2610
        %vm2617 = vmor %vm2615, %vm2616
        %v2618 = vsel %vm2617, %v2610, %v2614
        %v2619 = vand.u32 2147483647, %v2347
        %vm2620 = vcmp.eq.f32.partialorder %v2619, 8.507059e+37
        %v2621 = vand.u32 %v2347, 2147483648
        %v2622 = vor.u32 1.1754944e-38, %v2621
        %v2623 = vsel %vm2620, %v2622, %v2618
        %v2624 = vrcp.pop %v2349
        %v2625 = vmul.f32 %v2349, %v2624
        %v2626 = vsub.f32 1.0, %v2625
        %v2627 = vmul.f32 %v2624, %v2626
        %v2628 = vadd.f32 %v2624, %v2627
        %vm2629 = vweird.f32 %v2349
        %vm2630 = vweird.f32 %v2624
        %vm2631 = vmor %vm2629, %vm2630
        %v2632 = vsel %vm2631, %v2624, %v2628
        %v2633 = vand.u32 2147483647, %v2349
        %vm2634 = vcmp.eq.f32.partialorder %v2633, 8.507059e+37
        %v2635 = vand.u32 %v2349, 2147483648
        %v2636 = vor.u32 1.1754944e-38, %v2635
        %v2637 = vsel %vm2634, %v2636, %v2632
        %v2638 = vrcp.pop %v2352
        %v2639 = vmul.f32 %v2352, %v2638
        %v2640 = vsub.f32 1.0, %v2639
        %v2641 = vmul.f32 %v2638, %v2640
        %v2642 = vadd.f32 %v2638, %v2641
        %vm2643 = vweird.f32 %v2352
        %vm2644 = vweird.f32 %v2638
        %vm2645 = vmor %vm2643, %vm2644
        %v2646 = vsel %vm2645, %v2638, %v2642
        %v2647 = vand.u32 2147483647, %v2352
        %vm2648 = vcmp.eq.f32.partialorder %v2647, 8.507059e+37
        %v2649 = vand.u32 %v2352, 2147483648
        %v2650 = vor.u32 1.1754944e-38, %v2649
        %v2651 = vsel %vm2648, %v2650, %v2646
        %v2652 = vrcp.pop %v2354
        %v2653 = vmul.f32 %v2354, %v2652
        %v2654 = vsub.f32 1.0, %v2653
        %v2655 = vmul.f32 %v2652, %v2654
        %v2656 = vadd.f32 %v2652, %v2655
        %vm2657 = vweird.f32 %v2354
        %vm2658 = vweird.f32 %v2652
        %vm2659 = vmor %vm2657, %vm2658
        %v2660 = vsel %vm2659, %v2652, %v2656
        %v2661 = vand.u32 2147483647, %v2354
        %vm2662 = vcmp.eq.f32.partialorder %v2661, 8.507059e+37
        %v2663 = vand.u32 %v2354, 2147483648
        %v2664 = vor.u32 1.1754944e-38, %v2663
        %v2665 = vsel %vm2662, %v2664, %v2660
        %v2666 = vrcp.pop %v2357
        %v2667 = vmul.f32 %v2357, %v2666
        %v2668 = vsub.f32 1.0, %v2667
        %v2669 = vmul.f32 %v2666, %v2668
        %v2670 = vadd.f32 %v2666, %v2669
        %vm2671 = vweird.f32 %v2357
        %vm2672 = vweird.f32 %v2666
        %vm2673 = vmor %vm2671, %vm2672
        %v2674 = vsel %vm2673, %v2666, %v2670
        %v2675 = vand.u32 2147483647, %v2357
        %vm2676 = vcmp.eq.f32.partialorder %v2675, 8.507059e+37
        %v2677 = vand.u32 %v2357, 2147483648
        %v2678 = vor.u32 1.1754944e-38, %v2677
        %v2679 = vsel %vm2676, %v2678, %v2674
        %v2680 = vrcp.pop %v2359
        %v2681 = vmul.f32 %v2359, %v2680
        %v2682 = vsub.f32 1.0, %v2681
        %v2683 = vmul.f32 %v2680, %v2682
        %v2684 = vadd.f32 %v2680, %v2683
        %vm2685 = vweird.f32 %v2359
        %vm2686 = vweird.f32 %v2680
        %vm2687 = vmor %vm2685, %vm2686
        %v2688 = vsel %vm2687, %v2680, %v2684
        %v2689 = vand.u32 2147483647, %v2359
        %vm2690 = vcmp.eq.f32.partialorder %v2689, 8.507059e+37
        %v2691 = vand.u32 %v2359, 2147483648
        %v2692 = vor.u32 1.1754944e-38, %v2691
        %v2693 = vsel %vm2690, %v2692, %v2688
        %v2694 = vrcp.pop %v2362
        %v2695 = vmul.f32 %v2362, %v2694
        %v2696 = vsub.f32 1.0, %v2695
        %v2697 = vmul.f32 %v2694, %v2696
        %v2698 = vadd.f32 %v2694, %v2697
        %vm2699 = vweird.f32 %v2362
        %vm2700 = vweird.f32 %v2694
        %vm2701 = vmor %vm2699, %vm2700
        %v2702 = vsel %vm2701, %v2694, %v2698
        %v2703 = vand.u32 2147483647, %v2362
        %vm2704 = vcmp.eq.f32.partialorder %v2703, 8.507059e+37
        %v2705 = vand.u32 %v2362, 2147483648
        %v2706 = vor.u32 1.1754944e-38, %v2705
        %v2707 = vsel %vm2704, %v2706, %v2702
        %v2708 = vrcp.pop %v2364
        %v2709 = vmul.f32 %v2364, %v2708
        %v2710 = vsub.f32 1.0, %v2709
        %v2711 = vmul.f32 %v2708, %v2710
        %v2712 = vadd.f32 %v2708, %v2711
        %vm2713 = vweird.f32 %v2364
        %vm2714 = vweird.f32 %v2708
        %vm2715 = vmor %vm2713, %vm2714
        %v2716 = vsel %vm2715, %v2708, %v2712
        %v2717 = vand.u32 2147483647, %v2364
        %vm2718 = vcmp.eq.f32.partialorder %v2717, 8.507059e+37
        %v2719 = vand.u32 %v2364, 2147483648
        %v2720 = vor.u32 1.1754944e-38, %v2719
        %v2721 = vsel %vm2718, %v2720, %v2716
        %v2722 = vrcp.pop %v2367
        %v2723 = vmul.f32 %v2367, %v2722
        %v2724 = vsub.f32 1.0, %v2723
        %v2725 = vmul.f32 %v2722, %v2724
        %v2726 = vadd.f32 %v2722, %v2725
        %vm2727 = vweird.f32 %v2367
        %vm2728 = vweird.f32 %v2722
        %vm2729 = vmor %vm2727, %vm2728
        %v2730 = vsel %vm2729, %v2722, %v2726
        %v2731 = vand.u32 2147483647, %v2367
        %vm2732 = vcmp.eq.f32.partialorder %v2731, 8.507059e+37
        %v2733 = vand.u32 %v2367, 2147483648
        %v2734 = vor.u32 1.1754944e-38, %v2733
        %v2735 = vsel %vm2732, %v2734, %v2730
        %v2736 = vrcp.pop %v2369
        %v2737 = vmul.f32 %v2369, %v2736
        %v2738 = vsub.f32 1.0, %v2737
        %v2739 = vmul.f32 %v2736, %v2738
        %v2740 = vadd.f32 %v2736, %v2739
        %vm2741 = vweird.f32 %v2369
        %vm2742 = vweird.f32 %v2736
        %vm2743 = vmor %vm2741, %vm2742
        %v2744 = vsel %vm2743, %v2736, %v2740
        %v2745 = vand.u32 2147483647, %v2369
        %vm2746 = vcmp.eq.f32.partialorder %v2745, 8.507059e+37
        %v2747 = vand.u32 %v2369, 2147483648
        %v2748 = vor.u32 1.1754944e-38, %v2747
        %v2749 = vsel %vm2746, %v2748, %v2744
        %v2750 = vrcp.pop %v2372
        %v2751 = vmul.f32 %v2372, %v2750
        %v2752 = vsub.f32 1.0, %v2751
        %v2753 = vmul.f32 %v2750, %v2752
        %v2754 = vadd.f32 %v2750, %v2753
        %vm2755 = vweird.f32 %v2372
        %vm2756 = vweird.f32 %v2750
        %vm2757 = vmor %vm2755, %vm2756
        %v2758 = vsel %vm2757, %v2750, %v2754
        %v2759 = vand.u32 2147483647, %v2372
        %vm2760 = vcmp.eq.f32.partialorder %v2759, 8.507059e+37
        %v2761 = vand.u32 %v2372, 2147483648
        %v2762 = vor.u32 1.1754944e-38, %v2761
        %v2763 = vsel %vm2760, %v2762, %v2758
        %v2764 = vrcp.pop %v2374
        %v2765 = vmul.f32 %v2374, %v2764
        %v2766 = vsub.f32 1.0, %v2765
        %v2767 = vmul.f32 %v2764, %v2766
        %v2768 = vadd.f32 %v2764, %v2767
        %vm2769 = vweird.f32 %v2374
        %vm2770 = vweird.f32 %v2764
        %vm2771 = vmor %vm2769, %vm2770
        %v2772 = vsel %vm2771, %v2764, %v2768
        %v2773 = vand.u32 2147483647, %v2374
        %vm2774 = vcmp.eq.f32.partialorder %v2773, 8.507059e+37
        %v2775 = vand.u32 %v2374, 2147483648
        %v2776 = vor.u32 1.1754944e-38, %v2775
        %v2777 = vsel %vm2774, %v2776, %v2772
        %v2778 = vrcp.pop %v2377
        %v2779 = vmul.f32 %v2377, %v2778
        %v2780 = vsub.f32 1.0, %v2779
        %v2781 = vmul.f32 %v2778, %v2780
        %v2782 = vadd.f32 %v2778, %v2781
        %vm2783 = vweird.f32 %v2377
        %vm2784 = vweird.f32 %v2778
        %vm2785 = vmor %vm2783, %vm2784
        %v2786 = vsel %vm2785, %v2778, %v2782
        %v2787 = vand.u32 2147483647, %v2377
        %vm2788 = vcmp.eq.f32.partialorder %v2787, 8.507059e+37
        %v2789 = vand.u32 %v2377, 2147483648
        %v2790 = vor.u32 1.1754944e-38, %v2789
        %v2791 = vsel %vm2788, %v2790, %v2786
        %v2792 = vrcp.pop %v2379
        %v2793 = vmul.f32 %v2379, %v2792
        %v2794 = vsub.f32 1.0, %v2793
        %v2795 = vmul.f32 %v2792, %v2794
        %v2796 = vadd.f32 %v2792, %v2795
        %vm2797 = vweird.f32 %v2379
        %vm2798 = vweird.f32 %v2792
        %vm2799 = vmor %vm2797, %vm2798
        %v2800 = vsel %vm2799, %v2792, %v2796
        %v2801 = vand.u32 2147483647, %v2379
        %vm2802 = vcmp.eq.f32.partialorder %v2801, 8.507059e+37
        %v2803 = vand.u32 %v2379, 2147483648
        %v2804 = vor.u32 1.1754944e-38, %v2803
        %v2805 = vsel %vm2802, %v2804, %v2800
        %v2806 = vrcp.pop %v2382
        %v2807 = vmul.f32 %v2382, %v2806
        %v2808 = vsub.f32 1.0, %v2807
        %v2809 = vmul.f32 %v2806, %v2808
        %v2810 = vadd.f32 %v2806, %v2809
        %vm2811 = vweird.f32 %v2382
        %vm2812 = vweird.f32 %v2806
        %vm2813 = vmor %vm2811, %vm2812
        %v2814 = vsel %vm2813, %v2806, %v2810
        %v2815 = vand.u32 2147483647, %v2382
        %vm2816 = vcmp.eq.f32.partialorder %v2815, 8.507059e+37
        %v2817 = vand.u32 %v2382, 2147483648
        %v2818 = vor.u32 1.1754944e-38, %v2817
        %v2819 = vsel %vm2816, %v2818, %v2814
        %v2820 = vrcp.pop %v2384
        %v2821 = vmul.f32 %v2384, %v2820
        %v2822 = vsub.f32 1.0, %v2821
        %v2823 = vmul.f32 %v2820, %v2822
        %v2824 = vadd.f32 %v2820, %v2823
        %vm2825 = vweird.f32 %v2384
        %vm2826 = vweird.f32 %v2820
        %vm2827 = vmor %vm2825, %vm2826
        %v2828 = vsel %vm2827, %v2820, %v2824
        %v2829 = vand.u32 2147483647, %v2384
        %vm2830 = vcmp.eq.f32.partialorder %v2829, 8.507059e+37
        %v2831 = vand.u32 %v2384, 2147483648
        %v2832 = vor.u32 1.1754944e-38, %v2831
        %v2833 = vsel %vm2830, %v2832, %v2828
        %2835 = vset.pattern.permute.xlu0 32
        %2836 = vperm.xlu0 %2835, %v2399
        %v2837 = vpop.permute.xlu0 %2836
        %2840 = vset.pattern.permute.xlu0 32
        %2841 = vperm.xlu0 %2840, %v2413
        %v2842 = vpop.permute.xlu0 %2841
        %2845 = vset.pattern.permute.xlu0 32
        %2846 = vperm.xlu0 %2845, %v2427
        %v2847 = vpop.permute.xlu0 %2846
        %2850 = vset.pattern.permute.xlu0 32
        %2851 = vperm.xlu0 %2850, %v2441
        %v2852 = vpop.permute.xlu0 %2851
        %2855 = vset.pattern.permute.xlu0 32
        %2856 = vperm.xlu0 %2855, %v2455
        %v2857 = vpop.permute.xlu0 %2856
        %2860 = vset.pattern.permute.xlu0 32
        %2861 = vperm.xlu0 %2860, %v2469
        %v2862 = vpop.permute.xlu0 %2861
        %2865 = vset.pattern.permute.xlu0 32
        %2866 = vperm.xlu0 %2865, %v2483
        %v2867 = vpop.permute.xlu0 %2866
        %2870 = vset.pattern.permute.xlu0 32
        %2871 = vperm.xlu0 %2870, %v2497
        %v2872 = vpop.permute.xlu0 %2871
        %2875 = vset.pattern.permute.xlu0 32
        %2876 = vperm.xlu0 %2875, %v2511
        %v2877 = vpop.permute.xlu0 %2876
        %2880 = vset.pattern.permute.xlu0 32
        %2881 = vperm.xlu0 %2880, %v2525
        %v2882 = vpop.permute.xlu0 %2881
        %2885 = vset.pattern.permute.xlu0 32
        %2886 = vperm.xlu0 %2885, %v2539
        %v2887 = vpop.permute.xlu0 %2886
        %2890 = vset.pattern.permute.xlu0 32
        %2891 = vperm.xlu0 %2890, %v2553
        %v2892 = vpop.permute.xlu0 %2891
        %2895 = vset.pattern.permute.xlu0 32
        %2896 = vperm.xlu0 %2895, %v2567
        %v2897 = vpop.permute.xlu0 %2896
        %2900 = vset.pattern.permute.xlu0 32
        %2901 = vperm.xlu0 %2900, %v2581
        %v2902 = vpop.permute.xlu0 %2901
        %2905 = vset.pattern.permute.xlu0 32
        %2906 = vperm.xlu0 %2905, %v2595
        %v2907 = vpop.permute.xlu0 %2906
        %2910 = vset.pattern.permute.xlu0 32
        %2911 = vperm.xlu0 %2910, %v2609
        %v2912 = vpop.permute.xlu0 %2911
        %2915 = vset.pattern.permute.xlu0 32
        %2916 = vperm.xlu0 %2915, %v2623
        %v2917 = vpop.permute.xlu0 %2916
        %2920 = vset.pattern.permute.xlu0 32
        %2921 = vperm.xlu0 %2920, %v2637
        %v2922 = vpop.permute.xlu0 %2921
        %2925 = vset.pattern.permute.xlu0 32
        %2926 = vperm.xlu0 %2925, %v2651
        %v2927 = vpop.permute.xlu0 %2926
        %2930 = vset.pattern.permute.xlu0 32
        %2931 = vperm.xlu0 %2930, %v2665
        %v2932 = vpop.permute.xlu0 %2931
        %2935 = vset.pattern.permute.xlu0 32
        %2936 = vperm.xlu0 %2935, %v2679
        %v2937 = vpop.permute.xlu0 %2936
        %2940 = vset.pattern.permute.xlu0 32
        %2941 = vperm.xlu0 %2940, %v2693
        %v2942 = vpop.permute.xlu0 %2941
        %2945 = vset.pattern.permute.xlu0 32
        %2946 = vperm.xlu0 %2945, %v2707
        %v2947 = vpop.permute.xlu0 %2946
        %2950 = vset.pattern.permute.xlu0 32
        %2951 = vperm.xlu0 %2950, %v2721
        %v2952 = vpop.permute.xlu0 %2951
        %2955 = vset.pattern.permute.xlu0 32
        %2956 = vperm.xlu0 %2955, %v2735
        %v2957 = vpop.permute.xlu0 %2956
        %2960 = vset.pattern.permute.xlu0 32
        %2961 = vperm.xlu0 %2960, %v2749
        %v2962 = vpop.permute.xlu0 %2961
        %2965 = vset.pattern.permute.xlu0 32
        %2966 = vperm.xlu0 %2965, %v2763
        %v2967 = vpop.permute.xlu0 %2966
        %2970 = vset.pattern.permute.xlu0 32
        %2971 = vperm.xlu0 %2970, %v2777
        %v2972 = vpop.permute.xlu0 %2971
        %2975 = vset.pattern.permute.xlu0 32
        %2976 = vperm.xlu0 %2975, %v2791
        %v2977 = vpop.permute.xlu0 %2976
        %2980 = vset.pattern.permute.xlu0 32
        %2981 = vperm.xlu0 %2980, %v2805
        %v2982 = vpop.permute.xlu0 %2981
        %2985 = vset.pattern.permute.xlu0 32
        %2986 = vperm.xlu0 %2985, %v2819
        %v2987 = vpop.permute.xlu0 %2986
        %2990 = vset.pattern.permute.xlu0 32
        %2991 = vperm.xlu0 %2990, %v2833
        %v2992 = vpop.permute.xlu0 %2991
        %v2994 = vmul.f32 %v2250, %v2837
        %v2995 = vmul.f32 %v2252, %v2842
        %v2996 = vmul.f32 %v2255, %v2847
        %v2997 = vmul.f32 %v2257, %v2852
        %v2998 = vmul.f32 %v2260, %v2857
        %v2999 = vmul.f32 %v2262, %v2862
        %v3000 = vmul.f32 %v2265, %v2867
        %v3001 = vmul.f32 %v2267, %v2872
        %v3002 = vmul.f32 %v2270, %v2877
        %v3003 = vmul.f32 %v2272, %v2882
        %v3004 = vmul.f32 %v2275, %v2887
        %v3005 = vmul.f32 %v2277, %v2892
        %v3006 = vmul.f32 %v2280, %v2897
        %v3007 = vmul.f32 %v2282, %v2902
        %v3008 = vmul.f32 %v2285, %v2907
        %v3009 = vmul.f32 %v2287, %v2912
        %v3010 = vmul.f32 %v2347, %v2917
        %v3011 = vmul.f32 %v2349, %v2922
        %v3012 = vmul.f32 %v2352, %v2927
        %v3013 = vmul.f32 %v2354, %v2932
        %v3014 = vmul.f32 %v2357, %v2937
        %v3015 = vmul.f32 %v2359, %v2942
        %v3016 = vmul.f32 %v2362, %v2947
        %v3017 = vmul.f32 %v2364, %v2952
        %v3018 = vmul.f32 %v2367, %v2957
        %v3019 = vmul.f32 %v2369, %v2962
        %v3020 = vmul.f32 %v2372, %v2967
        %v3021 = vmul.f32 %v2374, %v2972
        %v3022 = vmul.f32 %v2377, %v2977
        %v3023 = vmul.f32 %v2379, %v2982
        %v3024 = vmul.f32 %v2382, %v2987
        %v3025 = vmul.f32 %v2384, %v2992
        %3026 = vst [vmem:[%s314] sm:$0xff] %v2994
        %3027 = vst [vmem:[%s314 + $0x8] sm:$0xff] %v2995
        %3028 = vst [vmem:[%s314 + $0x10] sm:$0xff] %v2996
        %3029 = vst [vmem:[%s314 + $0x18] sm:$0xff] %v2997
        %3030 = vst [vmem:[%s314 + $0x20] sm:$0xff] %v2998
        %3031 = vst [vmem:[%s314 + $0x28] sm:$0xff] %v2999
        %3032 = vst [vmem:[%s314 + $0x30] sm:$0xff] %v3000
        %3033 = vst [vmem:[%s314 + $0x38] sm:$0xff] %v3001
        %3034 = vst [vmem:[%s314 + $0x40] sm:$0xff] %v3002
        %3035 = vst [vmem:[%s314 + $0x48] sm:$0xff] %v3003
        %3036 = vst [vmem:[%s314 + $0x50] sm:$0xff] %v3004
        %3037 = vst [vmem:[%s314 + $0x58] sm:$0xff] %v3005
        %3038 = vst [vmem:[%s314 + $0x60] sm:$0xff] %v3006
        %3039 = vst [vmem:[%s314 + $0x68] sm:$0xff] %v3007
        %3040 = vst [vmem:[%s314 + $0x70] sm:$0xff] %v3008
        %3041 = vst [vmem:[%s314 + $0x78] sm:$0xff] %v3009
        %3042 = vst [vmem:[%s314 + $0x80] sm:$0xff] %v3010
        %3043 = vst [vmem:[%s314 + $0x88] sm:$0xff] %v3011
        %3044 = vst [vmem:[%s314 + $0x90] sm:$0xff] %v3012
        %3045 = vst [vmem:[%s314 + $0x98] sm:$0xff] %v3013
        %3046 = vst [vmem:[%s314 + $0xa0] sm:$0xff] %v3014
        %3047 = vst [vmem:[%s314 + $0xa8] sm:$0xff] %v3015
        %3048 = vst [vmem:[%s314 + $0xb0] sm:$0xff] %v3016
        %3049 = vst [vmem:[%s314 + $0xb8] sm:$0xff] %v3017
        %3050 = vst [vmem:[%s314 + $0xc0] sm:$0xff] %v3018
        %3051 = vst [vmem:[%s314 + $0xc8] sm:$0xff] %v3019
        %3052 = vst [vmem:[%s314 + $0xd0] sm:$0xff] %v3020
        %3053 = vst [vmem:[%s314 + $0xd8] sm:$0xff] %v3021
        %3054 = vst [vmem:[%s314 + $0xe0] sm:$0xff] %v3022
        %3055 = vst [vmem:[%s314 + $0xe8] sm:$0xff] %v3023
        %3056 = vst [vmem:[%s314 + $0xf0] sm:$0xff] %v3024
        %3057 = vst [vmem:[%s314 + $0xf8] sm:$0xff] %v3025
        %s3058 = sand.u32 %s132, 1
        %s3059 = scalar_lea.sflag [#allocation4], %s3058
        %s3060 = sand.u32 %s132, 1
        %s3061 = smul.addr %s3060, 256
        %s3062 = scalar_lea.vmem [#allocation10], %s3061
        // Predicated region
        $region53: #{tpu_custom_call.1} parent=35 // pred_check
          %p3063 = pneg %p142
        $region54: #{tpu_custom_call.1} parent=35 // pred_check_branch
          %3065 = sbr.rel (%p3063) target = $region56
        $region55: #{tpu_custom_call.1} parent=35 // pred_region
          %s3066 = smul.u32 2, %s25
          %3068 = vsyncadd %s3059, 0
          %s3069 = smul.addr %s3066, 16
          %s3070 = smul.addr %s3069, 8
          %s3071 = scalar_lea.hbm %s4, %s3070
          %s3072 = sshll.u32 %s3062, 4
          %s3073 = int_to_ptr.vmem [resolvable:$true] %s3072
          %s3074 = sshll.u32 %s3071, 4
          %s3075 = int_to_ptr.hbm [resolvable:$true] %s3074
          %3080 = dma.vmem_to_hbm [thread:$0]  %s3073, 4096, %s3075, %s3059, 128, 128, 8
        $region56: #{tpu_custom_call.1} parent=35 // pred_fallthru
          _
      $region36: #{tpu_custom_call.1} parent=5 // pred_fallthru
        _
      %p3081 = scmp.le.s32.totalorder 2, %s20
      // Predicated region
      $region57: #{tpu_custom_call.1} parent=5 // pred_check
        %p3082 = pneg %p3081
      $region58: #{tpu_custom_call.1} parent=5 // pred_check_branch
        %3084 = sbr.rel (%p3082) target = $region60
      $region59: #{tpu_custom_call.1} parent=5 // pred_region
        %s3085 = ssub.s32 %s20, 2
        // Predicated region
        $region61: #{tpu_custom_call.1} parent=59 // pred_check
          %p3086 = pneg %p148
        $region62: #{tpu_custom_call.1} parent=59 // pred_check_branch
          %3088 = sbr.rel (%p3086) target = $region64
        $region63: #{tpu_custom_call.1} parent=59 // pred_region
          %s3089 = sand.u32 %s133, 1
          %s3090 = scalar_lea.sflag [#allocation4], %s3089
          %s3091 = sand.u32 %s133, 1
          %s3092 = smul.addr %s3091, 256
          %s3093 = scalar_lea.vmem [#allocation10], %s3092
          %3095 = dma.done %s3090, 4096
        $region64: #{tpu_custom_call.1} parent=59 // pred_fallthru
          _
      $region60: #{tpu_custom_call.1} parent=5 // pred_fallthru
        _
    $region6: #{tpu_custom_call.1} parent=1 // loop_footer
      %s24 = sadd.s32 1, %s20
    $region7: #{tpu_custom_call.1} parent=1 // loop_footer_branch
      %19 = sbr.rel target = $region3
    $region8: #{tpu_custom_call.1} parent=1 // loop_exit
      _
    %3096 = vsyncpa [#allocation3], 1
    %s3097 = scalar_lea.sflag [#allocation3], 1
    %3098 = vsyncpa %s3097, 1
    %3099 = vsyncpa [#allocation6], 1
    %s3100 = scalar_lea.sflag [#allocation6], 1
    %3101 = vsyncpa %s3100, 1
    %3102 = vsyncpa [#allocation9], 1
    %3103 = vsyncpa [#allocation4], 1
    %s3104 = scalar_lea.sflag [#allocation4], 1
    %3105 = vsyncpa %s3104, 1

</llo_original>
